<compile_context>
chip_gen: v7x
topology: tpu7x:2x2x1
jax: 0.10.0
libtpu: 0.0.40
codegen_flags: <defaults>
</compile_context>

<pallas_src>
import functools

import jax
import jax.numpy as jnp
from jax.experimental import pallas as pl
from jax.experimental.pallas import tpu as pltpu

KSIZE = 3   # kernel_size=3, padding=1 ("same")
LANES = 128


def _round_up(n, m):
    return ((n + m - 1) // m) * m


def _pick_bh_chunk(bh, w, target_pixels=128):
    """Largest divisor r of bh with r*w <= target pixel rows per chunk."""
    best = 1
    for r in range(1, bh + 1):
        if bh % r == 0 and r * w <= max(target_pixels, w):
            best = r
    return best


def _convlstm_kernel(patch_ref, w_ref, b_ref, c_ref, hc_out_ref,
                     *, Ch, W, bh_chunk):
    # patch_ref  : (M, Kp)      im2col rows (bf16), Kp = 9*C zero-padded to %128
    # w_ref      : (Kp, 4*Ch)   conv weights (bf16), g-gate columns pre-scaled x2
    # b_ref      : (1, 4*Ch)    conv bias (f32), g-gate entries pre-scaled x2
    # c_ref      : (M, Ch)      previous cell state, one row per pixel (f32)
    # hc_out_ref : (M, 2*Ch)    [h_new | c_new] lane-concatenated output
    M = c_ref.shape[0]

    # One tall MXU matmul, f32 accumulation; bias added once (no VMEM scratch
    # accumulator, no read-modify-write passes).
    gates = jnp.dot(patch_ref[...], w_ref[...],
                    preferred_element_type=jnp.float32) + b_ref[...]

    # Elementwise phase in pixel-row chunks to bound vreg live ranges.
    m_chunk = bh_chunk * W
    for m0 in range(0, M, m_chunk):
        z = gates[m0:m0 + m_chunk, :]                 # (m_chunk, 4*Ch) f32
        s = jax.nn.sigmoid(z)                         # single packed EUP pass
        i = s[:, 0:Ch]
        f = s[:, Ch:2 * Ch]
        o = s[:, 2 * Ch:3 * Ch]
        sg = s[:, 3 * Ch:4 * Ch]                      # sigmoid(2*g_pre)
        c_old = c_ref[m0:m0 + m_chunk, :]
        # tanh(g_pre) = 2*sigmoid(2*g_pre) - 1  (the 2x lives in w/b already)
        c_new = f * c_old + 2.0 * (i * sg) - i
        h_new = o * jnp.tanh(c_new)
        hc = jnp.concatenate([h_new, c_new], axis=-1)  # (m_chunk, 2*Ch)
        hc_out_ref[m0:m0 + m_chunk, :] = hc.astype(hc_out_ref.dtype)


@functools.partial(jax.jit, static_argnames=("hidden_channels",))
def conv_lstm_cell(x, h, c, weight, bias, *, hidden_channels):
    """x: (B, Cin, H, W), h/c: (B, Ch, H, W), weight: (4*Ch, Cin+Ch, 3, 3),
    bias: (4*Ch,).  Returns (h_new, c_new) in NCHW, matching PyTorch."""
    B, Cin, H, W = x.shape
    Ch = hidden_channels
    C = Cin + Ch
    pad = KSIZE // 2
    M = B * H * W
    BH = B * H

    # ---- wrapper glue (hoist out of any time loop): NCHW -> NHWC, concat,
    # spatial pad, full im2col, K zero-padded to a multiple of 128 lanes. ----
    x_nhwc = jnp.transpose(x, (0, 2, 3, 1))
    h_nhwc = jnp.transpose(h, (0, 2, 3, 1))
    c_nhwc = jnp.transpose(c, (0, 2, 3, 1))
    combined = jnp.concatenate([x_nhwc, h_nhwc], axis=-1)            # (B,H,W,C)
    padded = jnp.pad(combined, ((0, 0), (pad, pad), (pad, pad), (0, 0)))

    K = KSIZE * KSIZE * C
    Kp = _round_up(K, LANES)
    patches = jnp.concatenate(
        [padded[:, kh:kh + H, kw:kw + W, :]
         for kh in range(KSIZE) for kw in range(KSIZE)], axis=-1)    # (B,H,W,9C)
    patches = patches.reshape(M, K)
    patches = jnp.pad(patches, ((0, 0), (0, Kp - K))).astype(jnp.bfloat16)

    # PyTorch OIHW -> (kh*3*C + kw*C + ic, oc), matching the patch column order.
    # Fold tanh's 2x into the g-gate columns / bias entries; zero-pad K rows.
    w_mat = jnp.transpose(weight, (2, 3, 1, 0)).reshape(K, 4 * Ch)   # f32
    gate_scale = jnp.concatenate(
        [jnp.ones((3 * Ch,), jnp.float32), jnp.full((Ch,), 2.0, jnp.float32)])
    w_mat = w_mat * gate_scale[None, :]
    w_mat = jnp.pad(w_mat, ((0, Kp - K), (0, 0))).astype(jnp.bfloat16)
    b2 = (bias.astype(jnp.float32) * gate_scale).reshape(1, 4 * Ch)

    c_rows = c_nhwc.reshape(M, Ch).astype(jnp.float32)

    bh_chunk = _pick_bh_chunk(BH, W)
    kernel = functools.partial(_convlstm_kernel, Ch=Ch, W=W, bh_chunk=bh_chunk)

    # Single grid step: the whole problem fits VMEM comfortably; one tall
    # matmul is best on single-TC chips (v5e/v6e).  On v7x one could split
    # the M rows 2-way with dimension_semantics=(pltpu.CORE_PARALLEL,).
    hc = pl.pallas_call(
        kernel,
        out_shape=jax.ShapeDtypeStruct((M, 2 * Ch), x.dtype),
        grid=(1,),
        in_specs=[
            pl.BlockSpec((M, Kp), lambda g: (0, 0)),
            pl.BlockSpec((Kp, 4 * Ch), lambda g: (0, 0)),
            pl.BlockSpec((1, 4 * Ch), lambda g: (0, 0)),
            pl.BlockSpec((M, Ch), lambda g: (0, 0)),
        ],
        out_specs=pl.BlockSpec((M, 2 * Ch), lambda g: (0, 0)),
        compiler_params=pltpu.CompilerParams(
            dimension_semantics=("arbitrary",)),
    )(patches, w_mat, b2, c_rows)

    hc = hc.reshape(B, H, W, 2 * Ch)
    h_new = jnp.transpose(hc[..., :Ch], (0, 3, 1, 2))   # back to NCHW
    c_new = jnp.transpose(hc[..., Ch:], (0, 3, 1, 2))
    return h_new, c_new


def _reference(x, h, c, weight, bias, hidden_channels):
    """Pure-JAX f32 reference mirroring the PyTorch module (NCHW conv)."""
    combined = jnp.concatenate([x, h], axis=1)
    gates = jax.lax.conv_general_dilated(
        combined, weight, window_strides=(1, 1), padding="SAME",
        dimension_numbers=("NCHW", "OIHW", "NCHW"))
    gates = gates + bias.reshape(1, -1, 1, 1)
    Ch = hidden_channels
    i = jax.nn.sigmoid(gates[:, 0:Ch])
    f = jax.nn.sigmoid(gates[:, Ch:2 * Ch])
    o = jax.nn.sigmoid(gates[:, 2 * Ch:3 * Ch])
    g = jnp.tanh(gates[:, 3 * Ch:4 * Ch])
    c_new = f * c + i * g
    h_new = o * jnp.tanh(c_new)
    return h_new, c_new


if __name__ == "__main__":
    B, Cin, Ch, H, W = 2, 4, 32, 16, 16

    key = jax.random.PRNGKey(0)
    kx, kh_, kc, kw_, kb = jax.random.split(key, 5)

    x = jax.random.normal(kx, (B, Cin, H, W), jnp.float32)
    h = jax.random.normal(kh_, (B, Ch, H, W), jnp.float32)
    c = jax.random.normal(kc, (B, Ch, H, W), jnp.float32)

    # Deterministic parameter init (shapes from nn.Conv2d(Cin+Ch, 4*Ch, 3, pad=1)).
    fan_in = (Cin + Ch) * KSIZE * KSIZE
    bound = 1.0 / (fan_in ** 0.5)
    weight = jax.random.uniform(kw_, (4 * Ch, Cin + Ch, KSIZE, KSIZE),
                                jnp.float32, -bound, bound)
    bias = jax.random.uniform(kb, (4 * Ch,), jnp.float32, -bound, bound)

    h_new, c_new = conv_lstm_cell(x, h, c, weight, bias, hidden_channels=Ch)
    jax.block_until_ready((h_new, c_new))

    h_exp, c_exp = _reference(x, h, c, weight, bias, Ch)
    # bf16 conv operands -> relaxed tolerance vs the f32 reference.
    assert jnp.allclose(h_new, h_exp, atol=3e-2, rtol=3e-2), "h mismatch"
    assert jnp.allclose(c_new, c_exp, atol=3e-2, rtol=3e-2), "c mismatch"

    print("KERNEL_OK")
</pallas_src>

<mosaic_0001>
module attributes {stable_mosaic.version = 11 : i64} {
  func.func @_convlstm_kernel(%arg0: i32, %arg1: memref<512x384xbf16, #tpu.memory_space<vmem>>, %arg2: memref<384x128xbf16, #tpu.memory_space<vmem>>, %arg3: memref<1x128xf32, #tpu.memory_space<vmem>>, %arg4: memref<512x32xf32, #tpu.memory_space<vmem>>, %arg5: memref<512x64xf32, #tpu.memory_space<vmem>>) attributes {dimension_semantics = [#tpu.dimension_semantics<arbitrary>], iteration_bounds = array<i64: 1>, scalar_prefetch = 0 : i64, scratch_operands = 0 : i64, tpu.core_type = #tpu.core_type<tc>, window_params = [{pipeline_mode = #tpu.pipeline_mode<synchronous>, transform_indices = @transform_0, window_bounds = array<i64: 512, 384>}, {pipeline_mode = #tpu.pipeline_mode<synchronous>, transform_indices = @transform_1, window_bounds = array<i64: 384, 128>}, {pipeline_mode = #tpu.pipeline_mode<synchronous>, transform_indices = @transform_2, window_bounds = array<i64: 1, 128>}, {pipeline_mode = #tpu.pipeline_mode<synchronous>, transform_indices = @transform_3, window_bounds = array<i64: 512, 32>}, {pipeline_mode = #tpu.pipeline_mode<synchronous>, transform_indices = @transform_4, window_bounds = array<i64: 512, 64>}]} {
    %c0 = arith.constant 0 : index
    %c0_0 = arith.constant 0 : index
    %0 = vector.load %arg1[%c0, %c0_0] : memref<512x384xbf16, #tpu.memory_space<vmem>>, vector<512x384xbf16>
    %c0_1 = arith.constant 0 : index
    %c0_2 = arith.constant 0 : index
    %1 = vector.load %arg2[%c0_1, %c0_2] : memref<384x128xbf16, #tpu.memory_space<vmem>>, vector<384x128xbf16>
    %cst = arith.constant dense<0.000000e+00> : vector<512x128xf32>
    %2 = tpu.matmul %0, %1, %cst {dimension_numbers = #tpu.dot_dimension_numbers<[1], [0], [0], [1], [0, 0, 1, 1], [], []>} : vector<512x384xbf16>, vector<384x128xbf16>, vector<512x128xf32> -> vector<512x128xf32>
    %c0_3 = arith.constant 0 : index
    %c0_4 = arith.constant 0 : index
    %3 = vector.load %arg3[%c0_3, %c0_4] : memref<1x128xf32, #tpu.memory_space<vmem>>, vector<1x128xf32>
    %4 = vector.broadcast %3 : vector<1x128xf32> to vector<512x128xf32>
    %5 = arith.addf %2, %4 : vector<512x128xf32>
    %6 = vector.extract_strided_slice %5 {offsets = [0, 0], sizes = [128, 128], strides = [1, 1]} : vector<512x128xf32> to vector<128x128xf32>
    %7 = arith.negf %6 : vector<128x128xf32>
    %8 = math.exp %7 : vector<128x128xf32>
    %cst_5 = arith.constant 1.000000e+00 : f32
    %9 = vector.broadcast %cst_5 : f32 to vector<128x128xf32>
    %10 = arith.addf %9, %8 : vector<128x128xf32>
    %11 = arith.divf %9, %10 : vector<128x128xf32>
    %12 = vector.extract_strided_slice %11 {offsets = [0, 0], sizes = [128, 32], strides = [1, 1]} : vector<128x128xf32> to vector<128x32xf32>
    %13 = vector.extract_strided_slice %11 {offsets = [0, 32], sizes = [128, 32], strides = [1, 1]} : vector<128x128xf32> to vector<128x32xf32>
    %14 = vector.extract_strided_slice %11 {offsets = [0, 64], sizes = [128, 32], strides = [1, 1]} : vector<128x128xf32> to vector<128x32xf32>
    %15 = vector.extract_strided_slice %11 {offsets = [0, 96], sizes = [128, 32], strides = [1, 1]} : vector<128x128xf32> to vector<128x32xf32>
    %c0_6 = arith.constant 0 : index
    %c0_7 = arith.constant 0 : index
    %16 = vector.load %arg4[%c0_6, %c0_7] : memref<512x32xf32, #tpu.memory_space<vmem>>, vector<128x32xf32>
    %17 = arith.mulf %13, %16 : vector<128x32xf32>
    %18 = arith.mulf %12, %15 : vector<128x32xf32>
    %cst_8 = arith.constant 2.000000e+00 : f32
    %19 = vector.broadcast %cst_8 : f32 to vector<128x32xf32>
    %20 = arith.mulf %19, %18 : vector<128x32xf32>
    %21 = arith.addf %17, %20 : vector<128x32xf32>
    %22 = arith.subf %21, %12 : vector<128x32xf32>
    %23 = math.tanh %22 : vector<128x32xf32>
    %24 = arith.mulf %14, %23 : vector<128x32xf32>
    %25 = tpu.concatenate %24, %22 in 1 : vector<128x32xf32>, vector<128x32xf32> -> vector<128x64xf32>
    %c0_9 = arith.constant 0 : index
    %c0_10 = arith.constant 0 : index
    %26 = vector.load %arg5[%c0_9, %c0_10] : memref<512x64xf32, #tpu.memory_space<vmem>>, vector<128x64xf32>
    tpu.vector_store %arg5[%c0_9, %c0_10], %25 {strides = array<i32>} : memref<512x64xf32, #tpu.memory_space<vmem>>, vector<128x64xf32>,
    %27 = vector.extract_strided_slice %5 {offsets = [128, 0], sizes = [128, 128], strides = [1, 1]} : vector<512x128xf32> to vector<128x128xf32>
    %28 = arith.negf %27 : vector<128x128xf32>
    %29 = math.exp %28 : vector<128x128xf32>
    %cst_11 = arith.constant 1.000000e+00 : f32
    %30 = vector.broadcast %cst_11 : f32 to vector<128x128xf32>
    %31 = arith.addf %30, %29 : vector<128x128xf32>
    %32 = arith.divf %30, %31 : vector<128x128xf32>
    %33 = vector.extract_strided_slice %32 {offsets = [0, 0], sizes = [128, 32], strides = [1, 1]} : vector<128x128xf32> to vector<128x32xf32>
    %34 = vector.extract_strided_slice %32 {offsets = [0, 32], sizes = [128, 32], strides = [1, 1]} : vector<128x128xf32> to vector<128x32xf32>
    %35 = vector.extract_strided_slice %32 {offsets = [0, 64], sizes = [128, 32], strides = [1, 1]} : vector<128x128xf32> to vector<128x32xf32>
    %36 = vector.extract_strided_slice %32 {offsets = [0, 96], sizes = [128, 32], strides = [1, 1]} : vector<128x128xf32> to vector<128x32xf32>
    %c128 = arith.constant 128 : index
    %c0_12 = arith.constant 0 : index
    %37 = vector.load %arg4[%c128, %c0_12] : memref<512x32xf32, #tpu.memory_space<vmem>>, vector<128x32xf32>
    %38 = arith.mulf %34, %37 : vector<128x32xf32>
    %39 = arith.mulf %33, %36 : vector<128x32xf32>
    %cst_13 = arith.constant 2.000000e+00 : f32
    %40 = vector.broadcast %cst_13 : f32 to vector<128x32xf32>
    %41 = arith.mulf %40, %39 : vector<128x32xf32>
    %42 = arith.addf %38, %41 : vector<128x32xf32>
    %43 = arith.subf %42, %33 : vector<128x32xf32>
    %44 = math.tanh %43 : vector<128x32xf32>
    %45 = arith.mulf %35, %44 : vector<128x32xf32>
    %46 = tpu.concatenate %45, %43 in 1 : vector<128x32xf32>, vector<128x32xf32> -> vector<128x64xf32>
    %c128_14 = arith.constant 128 : index
    %c0_15 = arith.constant 0 : index
    %47 = vector.load %arg5[%c128_14, %c0_15] : memref<512x64xf32, #tpu.memory_space<vmem>>, vector<128x64xf32>
    tpu.vector_store %arg5[%c128_14, %c0_15], %46 {strides = array<i32>} : memref<512x64xf32, #tpu.memory_space<vmem>>, vector<128x64xf32>,
    %48 = vector.extract_strided_slice %5 {offsets = [256, 0], sizes = [128, 128], strides = [1, 1]} : vector<512x128xf32> to vector<128x128xf32>
    %49 = arith.negf %48 : vector<128x128xf32>
    %50 = math.exp %49 : vector<128x128xf32>
    %cst_16 = arith.constant 1.000000e+00 : f32
    %51 = vector.broadcast %cst_16 : f32 to vector<128x128xf32>
    %52 = arith.addf %51, %50 : vector<128x128xf32>
    %53 = arith.divf %51, %52 : vector<128x128xf32>
    %54 = vector.extract_strided_slice %53 {offsets = [0, 0], sizes = [128, 32], strides = [1, 1]} : vector<128x128xf32> to vector<128x32xf32>
    %55 = vector.extract_strided_slice %53 {offsets = [0, 32], sizes = [128, 32], strides = [1, 1]} : vector<128x128xf32> to vector<128x32xf32>
    %56 = vector.extract_strided_slice %53 {offsets = [0, 64], sizes = [128, 32], strides = [1, 1]} : vector<128x128xf32> to vector<128x32xf32>
    %57 = vector.extract_strided_slice %53 {offsets = [0, 96], sizes = [128, 32], strides = [1, 1]} : vector<128x128xf32> to vector<128x32xf32>
    %c256 = arith.constant 256 : index
    %c0_17 = arith.constant 0 : index
    %58 = vector.load %arg4[%c256, %c0_17] : memref<512x32xf32, #tpu.memory_space<vmem>>, vector<128x32xf32>
    %59 = arith.mulf %55, %58 : vector<128x32xf32>
    %60 = arith.mulf %54, %57 : vector<128x32xf32>
    %cst_18 = arith.constant 2.000000e+00 : f32
    %61 = vector.broadcast %cst_18 : f32 to vector<128x32xf32>
    %62 = arith.mulf %61, %60 : vector<128x32xf32>
    %63 = arith.addf %59, %62 : vector<128x32xf32>
    %64 = arith.subf %63, %54 : vector<128x32xf32>
    %65 = math.tanh %64 : vector<128x32xf32>
    %66 = arith.mulf %56, %65 : vector<128x32xf32>
    %67 = tpu.concatenate %66, %64 in 1 : vector<128x32xf32>, vector<128x32xf32> -> vector<128x64xf32>
    %c256_19 = arith.constant 256 : index
    %c0_20 = arith.constant 0 : index
    %68 = vector.load %arg5[%c256_19, %c0_20] : memref<512x64xf32, #tpu.memory_space<vmem>>, vector<128x64xf32>
    tpu.vector_store %arg5[%c256_19, %c0_20], %67 {strides = array<i32>} : memref<512x64xf32, #tpu.memory_space<vmem>>, vector<128x64xf32>,
    %69 = vector.extract_strided_slice %5 {offsets = [384, 0], sizes = [128, 128], strides = [1, 1]} : vector<512x128xf32> to vector<128x128xf32>
    %70 = arith.negf %69 : vector<128x128xf32>
    %71 = math.exp %70 : vector<128x128xf32>
    %cst_21 = arith.constant 1.000000e+00 : f32
    %72 = vector.broadcast %cst_21 : f32 to vector<128x128xf32>
    %73 = arith.addf %72, %71 : vector<128x128xf32>
    %74 = arith.divf %72, %73 : vector<128x128xf32>
    %75 = vector.extract_strided_slice %74 {offsets = [0, 0], sizes = [128, 32], strides = [1, 1]} : vector<128x128xf32> to vector<128x32xf32>
    %76 = vector.extract_strided_slice %74 {offsets = [0, 32], sizes = [128, 32], strides = [1, 1]} : vector<128x128xf32> to vector<128x32xf32>
    %77 = vector.extract_strided_slice %74 {offsets = [0, 64], sizes = [128, 32], strides = [1, 1]} : vector<128x128xf32> to vector<128x32xf32>
    %78 = vector.extract_strided_slice %74 {offsets = [0, 96], sizes = [128, 32], strides = [1, 1]} : vector<128x128xf32> to vector<128x32xf32>
    %c384 = arith.constant 384 : index
    %c0_22 = arith.constant 0 : index
    %79 = vector.load %arg4[%c384, %c0_22] : memref<512x32xf32, #tpu.memory_space<vmem>>, vector<128x32xf32>
    %80 = arith.mulf %76, %79 : vector<128x32xf32>
    %81 = arith.mulf %75, %78 : vector<128x32xf32>
    %cst_23 = arith.constant 2.000000e+00 : f32
    %82 = vector.broadcast %cst_23 : f32 to vector<128x32xf32>
    %83 = arith.mulf %82, %81 : vector<128x32xf32>
    %84 = arith.addf %80, %83 : vector<128x32xf32>
    %85 = arith.subf %84, %75 : vector<128x32xf32>
    %86 = math.tanh %85 : vector<128x32xf32>
    %87 = arith.mulf %77, %86 : vector<128x32xf32>
    %88 = tpu.concatenate %87, %85 in 1 : vector<128x32xf32>, vector<128x32xf32> -> vector<128x64xf32>
    %c384_24 = arith.constant 384 : index
    %c0_25 = arith.constant 0 : index
    %89 = vector.load %arg5[%c384_24, %c0_25] : memref<512x64xf32, #tpu.memory_space<vmem>>, vector<128x64xf32>
    tpu.vector_store %arg5[%c384_24, %c0_25], %88 {strides = array<i32>} : memref<512x64xf32, #tpu.memory_space<vmem>>, vector<128x64xf32>,
    return
  }
  func.func @transform_0(%arg0: i32) -> (i32, i32) {
    %c0_i32 = arith.constant 0 : i32
    %c0_i32_0 = arith.constant 0 : i32
    %c0_i32_1 = arith.constant 0 : i32
    return %c0_i32, %c0_i32_0 : i32, i32
  }
  func.func @transform_1(%arg0: i32) -> (i32, i32) {
    %c0_i32 = arith.constant 0 : i32
    %c0_i32_0 = arith.constant 0 : i32
    %c0_i32_1 = arith.constant 0 : i32
    return %c0_i32, %c0_i32_0 : i32, i32
  }
  func.func @transform_2(%arg0: i32) -> (i32, i32) {
    %c0_i32 = arith.constant 0 : i32
    %c0_i32_0 = arith.constant 0 : i32
    %c0_i32_1 = arith.constant 0 : i32
    return %c0_i32, %c0_i32_0 : i32, i32
  }
  func.func @transform_3(%arg0: i32) -> (i32, i32) {
    %c0_i32 = arith.constant 0 : i32
    %c0_i32_0 = arith.constant 0 : i32
    %c0_i32_1 = arith.constant 0 : i32
    return %c0_i32, %c0_i32_0 : i32, i32
  }
  func.func @transform_4(%arg0: i32) -> (i32, i32) {
    %c0_i32 = arith.constant 0 : i32
    %c0_i32_0 = arith.constant 0 : i32
    %c0_i32_1 = arith.constant 0 : i32
    return %c0_i32, %c0_i32_0 : i32, i32
  }
}

</mosaic_0001>

<llo_original>
// kernel: conv_lstm_cell.1
$region0: #{conv_lstm_cell.1}
  #allocation0 [shape = 'u32[]', space=smem, size = 0x4, offset = 0x4, fixed_abs, tag = 'smem constant byte address 0x4 - core index']
  #allocation1 [shape = 'u32[144,128]{1,0:T(1,128)}', space=vmem, size = 0x12000, scoped, tag = 'internal scratch']
  %s0 = inlined_call_operand.vmem [shape: bf16[512,384], index: 0, kind: input, shape index: {}]
  %s1 = inlined_call_operand.vmem [shape: bf16[384,128], index: 1, kind: input, shape index: {}]
  %s2 = inlined_call_operand.vmem [shape: f32[1,128], index: 2, kind: input, shape index: {}]
  %s3 = inlined_call_operand.vmem [shape: f32[512,32], index: 3, kind: input, shape index: {}]
  %s4 = inlined_call_operand.vmem [shape: f32[512,64], index: 4, kind: output, shape index: {}]
  %s5 = sld [smem:[#allocation0]]
  $region26: #{conv_lstm_cell.1} parent=0
    _
  %s7 = ssub.s32 1, %s5
  %s8 = scalar_select 0, %s7, %s5
  // Predicated region
  $region2: #{conv_lstm_cell.1} parent=0 // pred_check
    _
  $region3: #{conv_lstm_cell.1} parent=0 // pred_check_branch
    %10 = sbr.rel (0) target = $region5
  $region4: #{conv_lstm_cell.1} parent=0 // pred_region
    _
  $region5: #{conv_lstm_cell.1} parent=0 // pred_fallthru
    _
  // Predicated region
  $region6: #{conv_lstm_cell.1} parent=0 // pred_check
    _
  $region7: #{conv_lstm_cell.1} parent=0 // pred_check_branch
    %12 = sbr.rel (0) target = $region9
  $region8: #{conv_lstm_cell.1} parent=0 // pred_region
    _
  $region9: #{conv_lstm_cell.1} parent=0 // pred_fallthru
    _
  // Predicated region
  $region10: #{conv_lstm_cell.1} parent=0 // pred_check
    _
  $region11: #{conv_lstm_cell.1} parent=0 // pred_check_branch
    %14 = sbr.rel (0) target = $region13
  $region12: #{conv_lstm_cell.1} parent=0 // pred_region
    _
  $region13: #{conv_lstm_cell.1} parent=0 // pred_fallthru
    _
  // Predicated region
  $region14: #{conv_lstm_cell.1} parent=0 // pred_check
    _
  $region15: #{conv_lstm_cell.1} parent=0 // pred_check_branch
    %16 = sbr.rel (0) target = $region17
  $region16: #{conv_lstm_cell.1} parent=0 // pred_region
    _
  $region17: #{conv_lstm_cell.1} parent=0 // pred_fallthru
    _
  %v18 = vld [vmem:[%s0] sm:$0xff]
  %v19 = vld [vmem:[%s0 + $0x8] sm:$0xf]
  %v20 = vld [vmem:[%s0 + $0xc] sm:$0xff]
  %v21 = vld [vmem:[%s0 + $0x14] sm:$0xf]
  %v22 = vld [vmem:[%s0 + $0x18] sm:$0xff]
  %v23 = vld [vmem:[%s0 + $0x20] sm:$0xf]
  %v24 = vld [vmem:[%s0 + $0x24] sm:$0xff]
  %v25 = vld [vmem:[%s0 + $0x2c] sm:$0xf]
  %v26 = vld [vmem:[%s0 + $0x30] sm:$0xff]
  %v27 = vld [vmem:[%s0 + $0x38] sm:$0xf]
  %v28 = vld [vmem:[%s0 + $0x3c] sm:$0xff]
  %v29 = vld [vmem:[%s0 + $0x44] sm:$0xf]
  %v30 = vld [vmem:[%s0 + $0x48] sm:$0xff]
  %v31 = vld [vmem:[%s0 + $0x50] sm:$0xf]
  %v32 = vld [vmem:[%s0 + $0x54] sm:$0xff]
  %v33 = vld [vmem:[%s0 + $0x5c] sm:$0xf]
  %v34 = vld [vmem:[%s0 + $0x60] sm:$0xff]
  %v35 = vld [vmem:[%s0 + $0x68] sm:$0xf]
  %v36 = vld [vmem:[%s0 + $0x6c] sm:$0xff]
  %v37 = vld [vmem:[%s0 + $0x74] sm:$0xf]
  %v38 = vld [vmem:[%s0 + $0x78] sm:$0xff]
  %v39 = vld [vmem:[%s0 + $0x80] sm:$0xf]
  %v40 = vld [vmem:[%s0 + $0x84] sm:$0xff]
  %v41 = vld [vmem:[%s0 + $0x8c] sm:$0xf]
  %v42 = vld [vmem:[%s0 + $0x90] sm:$0xff]
  %v43 = vld [vmem:[%s0 + $0x98] sm:$0xf]
  %v44 = vld [vmem:[%s0 + $0x9c] sm:$0xff]
  %v45 = vld [vmem:[%s0 + $0xa4] sm:$0xf]
  %v46 = vld [vmem:[%s0 + $0xa8] sm:$0xff]
  %v47 = vld [vmem:[%s0 + $0xb0] sm:$0xf]
  %v48 = vld [vmem:[%s0 + $0xb4] sm:$0xff]
  %v49 = vld [vmem:[%s0 + $0xbc] sm:$0xf]
  %v50 = vld [vmem:[%s0 + $0xc0] sm:$0xff]
  %v51 = vld [vmem:[%s0 + $0xc8] sm:$0xf]
  %v52 = vld [vmem:[%s0 + $0xcc] sm:$0xff]
  %v53 = vld [vmem:[%s0 + $0xd4] sm:$0xf]
  %v54 = vld [vmem:[%s0 + $0xd8] sm:$0xff]
  %v55 = vld [vmem:[%s0 + $0xe0] sm:$0xf]
  %v56 = vld [vmem:[%s0 + $0xe4] sm:$0xff]
  %v57 = vld [vmem:[%s0 + $0xec] sm:$0xf]
  %v58 = vld [vmem:[%s0 + $0xf0] sm:$0xff]
  %v59 = vld [vmem:[%s0 + $0xf8] sm:$0xf]
  %v60 = vld [vmem:[%s0 + $0xfc] sm:$0xff]
  %v61 = vld [vmem:[%s0 + $0x104] sm:$0xf]
  %v62 = vld [vmem:[%s0 + $0x108] sm:$0xff]
  %v63 = vld [vmem:[%s0 + $0x110] sm:$0xf]
  %v64 = vld [vmem:[%s0 + $0x114] sm:$0xff]
  %v65 = vld [vmem:[%s0 + $0x11c] sm:$0xf]
  %v66 = vld [vmem:[%s0 + $0x120] sm:$0xff]
  %v67 = vld [vmem:[%s0 + $0x128] sm:$0xf]
  %v68 = vld [vmem:[%s0 + $0x12c] sm:$0xff]
  %v69 = vld [vmem:[%s0 + $0x134] sm:$0xf]
  %v70 = vld [vmem:[%s0 + $0x138] sm:$0xff]
  %v71 = vld [vmem:[%s0 + $0x140] sm:$0xf]
  %v72 = vld [vmem:[%s0 + $0x144] sm:$0xff]
  %v73 = vld [vmem:[%s0 + $0x14c] sm:$0xf]
  %v74 = vld [vmem:[%s0 + $0x150] sm:$0xff]
  %v75 = vld [vmem:[%s0 + $0x158] sm:$0xf]
  %v76 = vld [vmem:[%s0 + $0x15c] sm:$0xff]
  %v77 = vld [vmem:[%s0 + $0x164] sm:$0xf]
  %v78 = vld [vmem:[%s0 + $0x168] sm:$0xff]
  %v79 = vld [vmem:[%s0 + $0x170] sm:$0xf]
  %v80 = vld [vmem:[%s0 + $0x174] sm:$0xff]
  %v81 = vld [vmem:[%s0 + $0x17c] sm:$0xf]
  %v82 = vld [vmem:[%s0 + $0x180] sm:$0xff]
  %v83 = vld [vmem:[%s0 + $0x188] sm:$0xf]
  %v84 = vld [vmem:[%s0 + $0x18c] sm:$0xff]
  %v85 = vld [vmem:[%s0 + $0x194] sm:$0xf]
  %v86 = vld [vmem:[%s0 + $0x198] sm:$0xff]
  %v87 = vld [vmem:[%s0 + $0x1a0] sm:$0xf]
  %v88 = vld [vmem:[%s0 + $0x1a4] sm:$0xff]
  %v89 = vld [vmem:[%s0 + $0x1ac] sm:$0xf]
  %v90 = vld [vmem:[%s0 + $0x1b0] sm:$0xff]
  %v91 = vld [vmem:[%s0 + $0x1b8] sm:$0xf]
  %v92 = vld [vmem:[%s0 + $0x1bc] sm:$0xff]
  %v93 = vld [vmem:[%s0 + $0x1c4] sm:$0xf]
  %v94 = vld [vmem:[%s0 + $0x1c8] sm:$0xff]
  %v95 = vld [vmem:[%s0 + $0x1d0] sm:$0xf]
  %v96 = vld [vmem:[%s0 + $0x1d4] sm:$0xff]
  %v97 = vld [vmem:[%s0 + $0x1dc] sm:$0xf]
  %v98 = vld [vmem:[%s0 + $0x1e0] sm:$0xff]
  %v99 = vld [vmem:[%s0 + $0x1e8] sm:$0xf]
  %v100 = vld [vmem:[%s0 + $0x1ec] sm:$0xff]
  %v101 = vld [vmem:[%s0 + $0x1f4] sm:$0xf]
  %v102 = vld [vmem:[%s0 + $0x1f8] sm:$0xff]
  %v103 = vld [vmem:[%s0 + $0x200] sm:$0xf]
  %v104 = vld [vmem:[%s0 + $0x204] sm:$0xff]
  %v105 = vld [vmem:[%s0 + $0x20c] sm:$0xf]
  %v106 = vld [vmem:[%s0 + $0x210] sm:$0xff]
  %v107 = vld [vmem:[%s0 + $0x218] sm:$0xf]
  %v108 = vld [vmem:[%s0 + $0x21c] sm:$0xff]
  %v109 = vld [vmem:[%s0 + $0x224] sm:$0xf]
  %v110 = vld [vmem:[%s0 + $0x228] sm:$0xff]
  %v111 = vld [vmem:[%s0 + $0x230] sm:$0xf]
  %v112 = vld [vmem:[%s0 + $0x234] sm:$0xff]
  %v113 = vld [vmem:[%s0 + $0x23c] sm:$0xf]
  %v114 = vld [vmem:[%s0 + $0x240] sm:$0xff]
  %v115 = vld [vmem:[%s0 + $0x248] sm:$0xf]
  %v116 = vld [vmem:[%s0 + $0x24c] sm:$0xff]
  %v117 = vld [vmem:[%s0 + $0x254] sm:$0xf]
  %v118 = vld [vmem:[%s0 + $0x258] sm:$0xff]
  %v119 = vld [vmem:[%s0 + $0x260] sm:$0xf]
  %v120 = vld [vmem:[%s0 + $0x264] sm:$0xff]
  %v121 = vld [vmem:[%s0 + $0x26c] sm:$0xf]
  %v122 = vld [vmem:[%s0 + $0x270] sm:$0xff]
  %v123 = vld [vmem:[%s0 + $0x278] sm:$0xf]
  %v124 = vld [vmem:[%s0 + $0x27c] sm:$0xff]
  %v125 = vld [vmem:[%s0 + $0x284] sm:$0xf]
  %v126 = vld [vmem:[%s0 + $0x288] sm:$0xff]
  %v127 = vld [vmem:[%s0 + $0x290] sm:$0xf]
  %v128 = vld [vmem:[%s0 + $0x294] sm:$0xff]
  %v129 = vld [vmem:[%s0 + $0x29c] sm:$0xf]
  %v130 = vld [vmem:[%s0 + $0x2a0] sm:$0xff]
  %v131 = vld [vmem:[%s0 + $0x2a8] sm:$0xf]
  %v132 = vld [vmem:[%s0 + $0x2ac] sm:$0xff]
  %v133 = vld [vmem:[%s0 + $0x2b4] sm:$0xf]
  %v134 = vld [vmem:[%s0 + $0x2b8] sm:$0xff]
  %v135 = vld [vmem:[%s0 + $0x2c0] sm:$0xf]
  %v136 = vld [vmem:[%s0 + $0x2c4] sm:$0xff]
  %v137 = vld [vmem:[%s0 + $0x2cc] sm:$0xf]
  %v138 = vld [vmem:[%s0 + $0x2d0] sm:$0xff]
  %v139 = vld [vmem:[%s0 + $0x2d8] sm:$0xf]
  %v140 = vld [vmem:[%s0 + $0x2dc] sm:$0xff]
  %v141 = vld [vmem:[%s0 + $0x2e4] sm:$0xf]
  %v142 = vld [vmem:[%s0 + $0x2e8] sm:$0xff]
  %v143 = vld [vmem:[%s0 + $0x2f0] sm:$0xf]
  %v144 = vld [vmem:[%s0 + $0x2f4] sm:$0xff]
  %v145 = vld [vmem:[%s0 + $0x2fc] sm:$0xf]
  %v146 = vld [vmem:[%s1] sm:$0xf]
  %v147 = vld [vmem:[%s1 + $0x4] sm:$0xf]
  %v148 = vld [vmem:[%s1 + $0x8] sm:$0xf]
  %v149 = vld [vmem:[%s1 + $0xc] sm:$0xf]
  %v150 = vld [vmem:[%s1 + $0x10] sm:$0xf]
  %v151 = vld [vmem:[%s1 + $0x14] sm:$0xf]
  %v152 = vld [vmem:[%s1 + $0x18] sm:$0xf]
  %v153 = vld [vmem:[%s1 + $0x1c] sm:$0xf]
  %v154 = vld [vmem:[%s1 + $0x20] sm:$0xf]
  %v155 = vld [vmem:[%s1 + $0x24] sm:$0xf]
  %v156 = vld [vmem:[%s1 + $0x28] sm:$0xf]
  %v157 = vld [vmem:[%s1 + $0x2c] sm:$0xf]
  %v158 = vld [vmem:[%s1 + $0x30] sm:$0xf]
  %v159 = vld [vmem:[%s1 + $0x34] sm:$0xf]
  %v160 = vld [vmem:[%s1 + $0x38] sm:$0xf]
  %v161 = vld [vmem:[%s1 + $0x3c] sm:$0xf]
  %v162 = vld [vmem:[%s1 + $0x40] sm:$0xf]
  %v163 = vld [vmem:[%s1 + $0x44] sm:$0xf]
  %v164 = vld [vmem:[%s1 + $0x48] sm:$0xf]
  %v165 = vld [vmem:[%s1 + $0x4c] sm:$0xf]
  %v166 = vld [vmem:[%s1 + $0x50] sm:$0xf]
  %v167 = vld [vmem:[%s1 + $0x54] sm:$0xf]
  %v168 = vld [vmem:[%s1 + $0x58] sm:$0xf]
  %v169 = vld [vmem:[%s1 + $0x5c] sm:$0xf]
  %v170 = vld [vmem:[%s1 + $0x60] sm:$0xf]
  %v171 = vld [vmem:[%s1 + $0x64] sm:$0xf]
  %v172 = vld [vmem:[%s1 + $0x68] sm:$0xf]
  %v173 = vld [vmem:[%s1 + $0x6c] sm:$0xf]
  %v174 = vld [vmem:[%s1 + $0x70] sm:$0xf]
  %v175 = vld [vmem:[%s1 + $0x74] sm:$0xf]
  %v176 = vld [vmem:[%s1 + $0x78] sm:$0xf]
  %v177 = vld [vmem:[%s1 + $0x7c] sm:$0xf]
  %v178 = vld [vmem:[%s1 + $0x80] sm:$0xf]
  %v179 = vld [vmem:[%s1 + $0x84] sm:$0xf]
  %v180 = vld [vmem:[%s1 + $0x88] sm:$0xf]
  %v181 = vld [vmem:[%s1 + $0x8c] sm:$0xf]
  %v182 = vld [vmem:[%s1 + $0x90] sm:$0xf]
  %v183 = vld [vmem:[%s1 + $0x94] sm:$0xf]
  %v184 = vld [vmem:[%s1 + $0x98] sm:$0xf]
  %v185 = vld [vmem:[%s1 + $0x9c] sm:$0xf]
  %v186 = vld [vmem:[%s1 + $0xa0] sm:$0xf]
  %v187 = vld [vmem:[%s1 + $0xa4] sm:$0xf]
  %v188 = vld [vmem:[%s1 + $0xa8] sm:$0xf]
  %v189 = vld [vmem:[%s1 + $0xac] sm:$0xf]
  %v190 = vld [vmem:[%s1 + $0xb0] sm:$0xf]
  %v191 = vld [vmem:[%s1 + $0xb4] sm:$0xf]
  %v192 = vld [vmem:[%s1 + $0xb8] sm:$0xf]
  %v193 = vld [vmem:[%s1 + $0xbc] sm:$0xf]
  %v194 = vld [vmem:[%s2] sm:$0x1]
  %v196 = vlaneseq
  %v197 = vshrl.u32 %v196, 7
  %v198 = vsub.s32 0, %v197
  %v199 = vrot.slane %v194, %v198
  %v329 = vunpack.c.l.b16 %v18
  %v330 = vunpack.c.h.b16 %v18
  %v331 = vunpack.c.l.b16 %v19
  %v332 = vunpack.c.l.b16 %v20
  %v333 = vunpack.c.h.b16 %v20
  %v334 = vunpack.c.l.b16 %v21
  %v335 = vunpack.c.l.b16 %v22
  %v336 = vunpack.c.h.b16 %v22
  %v337 = vunpack.c.l.b16 %v23
  %v338 = vunpack.c.l.b16 %v24
  %v339 = vunpack.c.h.b16 %v24
  %v340 = vunpack.c.l.b16 %v25
  %v341 = vunpack.c.l.b16 %v26
  %v342 = vunpack.c.h.b16 %v26
  %v343 = vunpack.c.l.b16 %v27
  %v344 = vunpack.c.l.b16 %v28
  %v345 = vunpack.c.h.b16 %v28
  %v346 = vunpack.c.l.b16 %v29
  %v347 = vunpack.c.l.b16 %v30
  %v348 = vunpack.c.h.b16 %v30
  %v349 = vunpack.c.l.b16 %v31
  %v350 = vunpack.c.l.b16 %v32
  %v351 = vunpack.c.h.b16 %v32
  %v352 = vunpack.c.l.b16 %v33
  %v353 = vunpack.c.l.b16 %v34
  %v354 = vunpack.c.h.b16 %v34
  %v355 = vunpack.c.l.b16 %v35
  %v356 = vunpack.c.l.b16 %v36
  %v357 = vunpack.c.h.b16 %v36
  %v358 = vunpack.c.l.b16 %v37
  %v359 = vunpack.c.l.b16 %v38
  %v360 = vunpack.c.h.b16 %v38
  %v361 = vunpack.c.l.b16 %v39
  %v362 = vunpack.c.l.b16 %v40
  %v363 = vunpack.c.h.b16 %v40
  %v364 = vunpack.c.l.b16 %v41
  %v365 = vunpack.c.l.b16 %v42
  %v366 = vunpack.c.h.b16 %v42
  %v367 = vunpack.c.l.b16 %v43
  %v368 = vunpack.c.l.b16 %v44
  %v369 = vunpack.c.h.b16 %v44
  %v370 = vunpack.c.l.b16 %v45
  %v371 = vunpack.c.l.b16 %v46
  %v372 = vunpack.c.h.b16 %v46
  %v373 = vunpack.c.l.b16 %v47
  %v374 = vunpack.c.l.b16 %v48
  %v375 = vunpack.c.h.b16 %v48
  %v376 = vunpack.c.l.b16 %v49
  %v377 = vunpack.c.l.b16 %v50
  %v378 = vunpack.c.h.b16 %v50
  %v379 = vunpack.c.l.b16 %v51
  %v380 = vunpack.c.l.b16 %v52
  %v381 = vunpack.c.h.b16 %v52
  %v382 = vunpack.c.l.b16 %v53
  %v383 = vunpack.c.l.b16 %v54
  %v384 = vunpack.c.h.b16 %v54
  %v385 = vunpack.c.l.b16 %v55
  %v386 = vunpack.c.l.b16 %v56
  %v387 = vunpack.c.h.b16 %v56
  %v388 = vunpack.c.l.b16 %v57
  %v389 = vunpack.c.l.b16 %v58
  %v390 = vunpack.c.h.b16 %v58
  %v391 = vunpack.c.l.b16 %v59
  %v392 = vunpack.c.l.b16 %v60
  %v393 = vunpack.c.h.b16 %v60
  %v394 = vunpack.c.l.b16 %v61
  %v395 = vunpack.c.l.b16 %v62
  %v396 = vunpack.c.h.b16 %v62
  %v397 = vunpack.c.l.b16 %v63
  %v398 = vunpack.c.l.b16 %v64
  %v399 = vunpack.c.h.b16 %v64
  %v400 = vunpack.c.l.b16 %v65
  %v401 = vunpack.c.l.b16 %v66
  %v402 = vunpack.c.h.b16 %v66
  %v403 = vunpack.c.l.b16 %v67
  %v404 = vunpack.c.l.b16 %v68
  %v405 = vunpack.c.h.b16 %v68
  %v406 = vunpack.c.l.b16 %v69
  %v407 = vunpack.c.l.b16 %v70
  %v408 = vunpack.c.h.b16 %v70
  %v409 = vunpack.c.l.b16 %v71
  %v410 = vunpack.c.l.b16 %v72
  %v411 = vunpack.c.h.b16 %v72
  %v412 = vunpack.c.l.b16 %v73
  %v413 = vunpack.c.l.b16 %v74
  %v414 = vunpack.c.h.b16 %v74
  %v415 = vunpack.c.l.b16 %v75
  %v416 = vunpack.c.l.b16 %v76
  %v417 = vunpack.c.h.b16 %v76
  %v418 = vunpack.c.l.b16 %v77
  %v419 = vunpack.c.l.b16 %v78
  %v420 = vunpack.c.h.b16 %v78
  %v421 = vunpack.c.l.b16 %v79
  %v422 = vunpack.c.l.b16 %v80
  %v423 = vunpack.c.h.b16 %v80
  %v424 = vunpack.c.l.b16 %v81
  %v425 = vunpack.c.l.b16 %v82
  %v426 = vunpack.c.h.b16 %v82
  %v427 = vunpack.c.l.b16 %v83
  %v428 = vunpack.c.l.b16 %v84
  %v429 = vunpack.c.h.b16 %v84
  %v430 = vunpack.c.l.b16 %v85
  %v431 = vunpack.c.l.b16 %v86
  %v432 = vunpack.c.h.b16 %v86
  %v433 = vunpack.c.l.b16 %v87
  %v434 = vunpack.c.l.b16 %v88
  %v435 = vunpack.c.h.b16 %v88
  %v436 = vunpack.c.l.b16 %v89
  %v437 = vunpack.c.l.b16 %v90
  %v438 = vunpack.c.h.b16 %v90
  %v439 = vunpack.c.l.b16 %v91
  %v440 = vunpack.c.l.b16 %v92
  %v441 = vunpack.c.h.b16 %v92
  %v442 = vunpack.c.l.b16 %v93
  %v443 = vunpack.c.l.b16 %v94
  %v444 = vunpack.c.h.b16 %v94
  %v445 = vunpack.c.l.b16 %v95
  %v446 = vunpack.c.l.b16 %v96
  %v447 = vunpack.c.h.b16 %v96
  %v448 = vunpack.c.l.b16 %v97
  %v449 = vunpack.c.l.b16 %v98
  %v450 = vunpack.c.h.b16 %v98
  %v451 = vunpack.c.l.b16 %v99
  %v452 = vunpack.c.l.b16 %v100
  %v453 = vunpack.c.h.b16 %v100
  %v454 = vunpack.c.l.b16 %v101
  %v455 = vunpack.c.l.b16 %v102
  %v456 = vunpack.c.h.b16 %v102
  %v457 = vunpack.c.l.b16 %v103
  %v458 = vunpack.c.l.b16 %v104
  %v459 = vunpack.c.h.b16 %v104
  %v460 = vunpack.c.l.b16 %v105
  %v461 = vunpack.c.l.b16 %v106
  %v462 = vunpack.c.h.b16 %v106
  %v463 = vunpack.c.l.b16 %v107
  %v464 = vunpack.c.l.b16 %v108
  %v465 = vunpack.c.h.b16 %v108
  %v466 = vunpack.c.l.b16 %v109
  %v467 = vunpack.c.l.b16 %v110
  %v468 = vunpack.c.h.b16 %v110
  %v469 = vunpack.c.l.b16 %v111
  %v470 = vunpack.c.l.b16 %v112
  %v471 = vunpack.c.h.b16 %v112
  %v472 = vunpack.c.l.b16 %v113
  %v473 = vunpack.c.l.b16 %v114
  %v474 = vunpack.c.h.b16 %v114
  %v475 = vunpack.c.l.b16 %v115
  %v476 = vunpack.c.l.b16 %v116
  %v477 = vunpack.c.h.b16 %v116
  %v478 = vunpack.c.l.b16 %v117
  %v479 = vunpack.c.l.b16 %v118
  %v480 = vunpack.c.h.b16 %v118
  %v481 = vunpack.c.l.b16 %v119
  %v482 = vunpack.c.l.b16 %v120
  %v483 = vunpack.c.h.b16 %v120
  %v484 = vunpack.c.l.b16 %v121
  %v485 = vunpack.c.l.b16 %v122
  %v486 = vunpack.c.h.b16 %v122
  %v487 = vunpack.c.l.b16 %v123
  %v488 = vunpack.c.l.b16 %v124
  %v489 = vunpack.c.h.b16 %v124
  %v490 = vunpack.c.l.b16 %v125
  %v491 = vunpack.c.l.b16 %v126
  %v492 = vunpack.c.h.b16 %v126
  %v493 = vunpack.c.l.b16 %v127
  %v494 = vunpack.c.l.b16 %v128
  %v495 = vunpack.c.h.b16 %v128
  %v496 = vunpack.c.l.b16 %v129
  %v497 = vunpack.c.l.b16 %v130
  %v498 = vunpack.c.h.b16 %v130
  %v499 = vunpack.c.l.b16 %v131
  %v500 = vunpack.c.l.b16 %v132
  %v501 = vunpack.c.h.b16 %v132
  %v502 = vunpack.c.l.b16 %v133
  %v503 = vunpack.c.l.b16 %v134
  %v504 = vunpack.c.h.b16 %v134
  %v505 = vunpack.c.l.b16 %v135
  %v506 = vunpack.c.l.b16 %v136
  %v507 = vunpack.c.h.b16 %v136
  %v508 = vunpack.c.l.b16 %v137
  %v509 = vunpack.c.l.b16 %v138
  %v510 = vunpack.c.h.b16 %v138
  %v511 = vunpack.c.l.b16 %v139
  %v512 = vunpack.c.l.b16 %v140
  %v513 = vunpack.c.h.b16 %v140
  %v514 = vunpack.c.l.b16 %v141
  %v515 = vunpack.c.l.b16 %v142
  %v516 = vunpack.c.h.b16 %v142
  %v517 = vunpack.c.l.b16 %v143
  %v518 = vunpack.c.l.b16 %v144
  %v519 = vunpack.c.h.b16 %v144
  %v520 = vunpack.c.l.b16 %v145
  %v521 = vpack.c.b16 %v332, %v329
  %v522 = vpack.c.b16 %v333, %v330
  %v523 = vpack.c.b16 %v334, %v331
  %v524 = vpack.c.b16 %v338, %v335
  %v525 = vpack.c.b16 %v339, %v336
  %v526 = vpack.c.b16 %v340, %v337
  %v527 = vpack.c.b16 %v344, %v341
  %v528 = vpack.c.b16 %v345, %v342
  %v529 = vpack.c.b16 %v346, %v343
  %v530 = vpack.c.b16 %v350, %v347
  %v531 = vpack.c.b16 %v351, %v348
  %v532 = vpack.c.b16 %v352, %v349
  %v533 = vpack.c.b16 %v356, %v353
  %v534 = vpack.c.b16 %v357, %v354
  %v535 = vpack.c.b16 %v358, %v355
  %v536 = vpack.c.b16 %v362, %v359
  %v537 = vpack.c.b16 %v363, %v360
  %v538 = vpack.c.b16 %v364, %v361
  %v539 = vpack.c.b16 %v368, %v365
  %v540 = vpack.c.b16 %v369, %v366
  %v541 = vpack.c.b16 %v370, %v367
  %v542 = vpack.c.b16 %v374, %v371
  %v543 = vpack.c.b16 %v375, %v372
  %v544 = vpack.c.b16 %v376, %v373
  %v545 = vpack.c.b16 %v380, %v377
  %v546 = vpack.c.b16 %v381, %v378
  %v547 = vpack.c.b16 %v382, %v379
  %v548 = vpack.c.b16 %v386, %v383
  %v549 = vpack.c.b16 %v387, %v384
  %v550 = vpack.c.b16 %v388, %v385
  %v551 = vpack.c.b16 %v392, %v389
  %v552 = vpack.c.b16 %v393, %v390
  %v553 = vpack.c.b16 %v394, %v391
  %v554 = vpack.c.b16 %v398, %v395
  %v555 = vpack.c.b16 %v399, %v396
  %v556 = vpack.c.b16 %v400, %v397
  %v557 = vpack.c.b16 %v404, %v401
  %v558 = vpack.c.b16 %v405, %v402
  %v559 = vpack.c.b16 %v406, %v403
  %v560 = vpack.c.b16 %v410, %v407
  %v561 = vpack.c.b16 %v411, %v408
  %v562 = vpack.c.b16 %v412, %v409
  %v563 = vpack.c.b16 %v416, %v413
  %v564 = vpack.c.b16 %v417, %v414
  %v565 = vpack.c.b16 %v418, %v415
  %v566 = vpack.c.b16 %v422, %v419
  %v567 = vpack.c.b16 %v423, %v420
  %v568 = vpack.c.b16 %v424, %v421
  %v569 = vpack.c.b16 %v428, %v425
  %v570 = vpack.c.b16 %v429, %v426
  %v571 = vpack.c.b16 %v430, %v427
  %v572 = vpack.c.b16 %v434, %v431
  %v573 = vpack.c.b16 %v435, %v432
  %v574 = vpack.c.b16 %v436, %v433
  %v575 = vpack.c.b16 %v440, %v437
  %v576 = vpack.c.b16 %v441, %v438
  %v577 = vpack.c.b16 %v442, %v439
  %v578 = vpack.c.b16 %v446, %v443
  %v579 = vpack.c.b16 %v447, %v444
  %v580 = vpack.c.b16 %v448, %v445
  %v581 = vpack.c.b16 %v452, %v449
  %v582 = vpack.c.b16 %v453, %v450
  %v583 = vpack.c.b16 %v454, %v451
  %v584 = vpack.c.b16 %v458, %v455
  %v585 = vpack.c.b16 %v459, %v456
  %v586 = vpack.c.b16 %v460, %v457
  %v587 = vpack.c.b16 %v464, %v461
  %v588 = vpack.c.b16 %v465, %v462
  %v589 = vpack.c.b16 %v466, %v463
  %v590 = vpack.c.b16 %v470, %v467
  %v591 = vpack.c.b16 %v471, %v468
  %v592 = vpack.c.b16 %v472, %v469
  %v593 = vpack.c.b16 %v476, %v473
  %v594 = vpack.c.b16 %v477, %v474
  %v595 = vpack.c.b16 %v478, %v475
  %v596 = vpack.c.b16 %v482, %v479
  %v597 = vpack.c.b16 %v483, %v480
  %v598 = vpack.c.b16 %v484, %v481
  %v599 = vpack.c.b16 %v488, %v485
  %v600 = vpack.c.b16 %v489, %v486
  %v601 = vpack.c.b16 %v490, %v487
  %v602 = vpack.c.b16 %v494, %v491
  %v603 = vpack.c.b16 %v495, %v492
  %v604 = vpack.c.b16 %v496, %v493
  %v605 = vpack.c.b16 %v500, %v497
  %v606 = vpack.c.b16 %v501, %v498
  %v607 = vpack.c.b16 %v502, %v499
  %v608 = vpack.c.b16 %v506, %v503
  %v609 = vpack.c.b16 %v507, %v504
  %v610 = vpack.c.b16 %v508, %v505
  %v611 = vpack.c.b16 %v512, %v509
  %v612 = vpack.c.b16 %v513, %v510
  %v613 = vpack.c.b16 %v514, %v511
  %v614 = vpack.c.b16 %v518, %v515
  %v615 = vpack.c.b16 %v519, %v516
  %v616 = vpack.c.b16 %v520, %v517
  %v761 = vunpack.c.l.b16 %v146
  %v762 = vunpack.c.l.b16 %v147
  %v763 = vunpack.c.l.b16 %v148
  %v764 = vunpack.c.l.b16 %v149
  %v765 = vunpack.c.l.b16 %v150
  %v766 = vunpack.c.l.b16 %v151
  %v767 = vunpack.c.l.b16 %v152
  %v768 = vunpack.c.l.b16 %v153
  %v769 = vunpack.c.l.b16 %v154
  %v770 = vunpack.c.l.b16 %v155
  %v771 = vunpack.c.l.b16 %v156
  %v772 = vunpack.c.l.b16 %v157
  %v773 = vunpack.c.l.b16 %v158
  %v774 = vunpack.c.l.b16 %v159
  %v775 = vunpack.c.l.b16 %v160
  %v776 = vunpack.c.l.b16 %v161
  %v777 = vunpack.c.l.b16 %v162
  %v778 = vunpack.c.l.b16 %v163
  %v779 = vunpack.c.l.b16 %v164
  %v780 = vunpack.c.l.b16 %v165
  %v781 = vunpack.c.l.b16 %v166
  %v782 = vunpack.c.l.b16 %v167
  %v783 = vunpack.c.l.b16 %v168
  %v784 = vunpack.c.l.b16 %v169
  %v785 = vunpack.c.l.b16 %v170
  %v786 = vunpack.c.l.b16 %v171
  %v787 = vunpack.c.l.b16 %v172
  %v788 = vunpack.c.l.b16 %v173
  %v789 = vunpack.c.l.b16 %v174
  %v790 = vunpack.c.l.b16 %v175
  %v791 = vunpack.c.l.b16 %v176
  %v792 = vunpack.c.l.b16 %v177
  %v793 = vunpack.c.l.b16 %v178
  %v794 = vunpack.c.l.b16 %v179
  %v795 = vunpack.c.l.b16 %v180
  %v796 = vunpack.c.l.b16 %v181
  %v797 = vunpack.c.l.b16 %v182
  %v798 = vunpack.c.l.b16 %v183
  %v799 = vunpack.c.l.b16 %v184
  %v800 = vunpack.c.l.b16 %v185
  %v801 = vunpack.c.l.b16 %v186
  %v802 = vunpack.c.l.b16 %v187
  %v803 = vunpack.c.l.b16 %v188
  %v804 = vunpack.c.l.b16 %v189
  %v805 = vunpack.c.l.b16 %v190
  %v806 = vunpack.c.l.b16 %v191
  %v807 = vunpack.c.l.b16 %v192
  %v808 = vunpack.c.l.b16 %v193
  %v809 = vpack.c.b16 %v762, %v761
  %v810 = vpack.c.b16 %v764, %v763
  %v811 = vpack.c.b16 %v766, %v765
  %v812 = vpack.c.b16 %v768, %v767
  %v813 = vpack.c.b16 %v770, %v769
  %v814 = vpack.c.b16 %v772, %v771
  %v815 = vpack.c.b16 %v774, %v773
  %v816 = vpack.c.b16 %v776, %v775
  %v817 = vpack.c.b16 %v778, %v777
  %v818 = vpack.c.b16 %v780, %v779
  %v819 = vpack.c.b16 %v782, %v781
  %v820 = vpack.c.b16 %v784, %v783
  %v821 = vpack.c.b16 %v786, %v785
  %v822 = vpack.c.b16 %v788, %v787
  %v823 = vpack.c.b16 %v790, %v789
  %v824 = vpack.c.b16 %v792, %v791
  %v825 = vpack.c.b16 %v794, %v793
  %v826 = vpack.c.b16 %v796, %v795
  %v827 = vpack.c.b16 %v798, %v797
  %v828 = vpack.c.b16 %v800, %v799
  %v829 = vpack.c.b16 %v802, %v801
  %v830 = vpack.c.b16 %v804, %v803
  %v831 = vpack.c.b16 %v806, %v805
  %v832 = vpack.c.b16 %v808, %v807
  %857 = vmatprep.subr.bf16.mxu0 0
  %858 = vmatpush1.bf16.msra.mxu0 %v809
  %859 = vmatprep.subr.bf16.mxu0 0
  %860 = vmatpush1.bf16.msra.mxu0 %v810
  %861 = vmatprep.subr.bf16.mxu0 0
  %862 = vmatpush1.bf16.msra.mxu0 %v811
  %863 = vmatprep.subr.bf16.mxu0 0
  %864 = vmatpush1.bf16.msra.mxu0 %v812
  %865 = vmatprep.subr.bf16.mxu0 0
  %866 = vmatpush1.bf16.msra.mxu0 %v813
  %867 = vmatprep.subr.bf16.mxu0 0
  %868 = vmatpush1.bf16.msra.mxu0 %v814
  %869 = vmatprep.subr.bf16.mxu0 0
  %870 = vmatpush1.bf16.msra.mxu0 %v815
  %871 = vmatprep.subr.bf16.mxu0 0
  %872 = vmatpush1.bf16.msra.mxu0 %v816
  %873 = vmatprep.subr.bf16.mxu0 0
  %874 = vmatpush1.bf16.msra.mxu0 %v817
  %875 = vmatprep.subr.bf16.mxu0 0
  %876 = vmatpush1.bf16.msra.mxu0 %v818
  %877 = vmatprep.subr.bf16.mxu0 0
  %878 = vmatpush1.bf16.msra.mxu0 %v819
  %879 = vmatprep.subr.bf16.mxu0 0
  %880 = vmatpush1.bf16.msra.mxu0 %v820
  %881 = vmatprep.subr.bf16.mxu0 0
  %882 = vmatpush1.bf16.msra.mxu0 %v821
  %883 = vmatprep.subr.bf16.mxu0 0
  %884 = vmatpush1.bf16.msra.mxu0 %v822
  %885 = vmatprep.subr.bf16.mxu0 0
  %886 = vmatpush1.bf16.msra.mxu0 %v823
  %887 = vmatprep.subr.bf16.mxu0 0
  %888 = vmatpush1.bf16.msra.mxu0 %v824
  %889 = vmatprep.mubr.bf16.mxu0 %v522
  %890 = vmatmul.mubr.bf16.gmra.mrb[0].mxu0 %v521
  %v891 = vpop.f32.mrb[0].mxu0
  %v892 = vadd.f32 %v199, %v891
  %v893 = vpop.f32.mrb[0].mxu0
  %v894 = vpop.f32.mrb[0].mxu0
  %v895 = vadd.f32 %v199, %v894
  %v896 = vpop.f32.mrb[0].mxu0
  %897 = vmatprep.mubr.bf16.mxu0 %v525
  %898 = vmatmul.mubr.bf16.gmra.mrb[0].mxu0 %v524
  %v899 = vpop.f32.mrb[0].mxu0
  %v900 = vadd.f32 %v199, %v899
  %v901 = vpop.f32.mrb[0].mxu0
  %v902 = vpop.f32.mrb[0].mxu0
  %v903 = vadd.f32 %v199, %v902
  %v904 = vpop.f32.mrb[0].mxu0
  %905 = vmatprep.mubr.bf16.mxu0 %v528
  %906 = vmatmul.mubr.bf16.gmra.mrb[0].mxu0 %v527
  %v907 = vpop.f32.mrb[0].mxu0
  %v908 = vadd.f32 %v199, %v907
  %v909 = vpop.f32.mrb[0].mxu0
  %v910 = vpop.f32.mrb[0].mxu0
  %v911 = vadd.f32 %v199, %v910
  %v912 = vpop.f32.mrb[0].mxu0
  %913 = vmatprep.mubr.bf16.mxu0 %v531
  %914 = vmatmul.mubr.bf16.gmra.mrb[0].mxu0 %v530
  %v915 = vpop.f32.mrb[0].mxu0
  %v916 = vadd.f32 %v199, %v915
  %v917 = vpop.f32.mrb[0].mxu0
  %v918 = vpop.f32.mrb[0].mxu0
  %v919 = vadd.f32 %v199, %v918
  %v920 = vpop.f32.mrb[0].mxu0
  %921 = vmatprep.mubr.bf16.mxu0 %v534
  %922 = vmatmul.mubr.bf16.gmra.mrb[0].mxu0 %v533
  %v923 = vpop.f32.mrb[0].mxu0
  %v924 = vadd.f32 %v199, %v923
  %v925 = vpop.f32.mrb[0].mxu0
  %v926 = vpop.f32.mrb[0].mxu0
  %v927 = vadd.f32 %v199, %v926
  %v928 = vpop.f32.mrb[0].mxu0
  %929 = vmatprep.mubr.bf16.mxu0 %v537
  %930 = vmatmul.mubr.bf16.gmra.mrb[0].mxu0 %v536
  %v931 = vpop.f32.mrb[0].mxu0
  %v932 = vadd.f32 %v199, %v931
  %v933 = vpop.f32.mrb[0].mxu0
  %v934 = vpop.f32.mrb[0].mxu0
  %v935 = vadd.f32 %v199, %v934
  %v936 = vpop.f32.mrb[0].mxu0
  %937 = vmatprep.mubr.bf16.mxu0 %v540
  %938 = vmatmul.mubr.bf16.gmra.mrb[0].mxu0 %v539
  %v939 = vpop.f32.mrb[0].mxu0
  %v940 = vadd.f32 %v199, %v939
  %v941 = vpop.f32.mrb[0].mxu0
  %v942 = vpop.f32.mrb[0].mxu0
  %v943 = vadd.f32 %v199, %v942
  %v944 = vpop.f32.mrb[0].mxu0
  %945 = vmatprep.mubr.bf16.mxu0 %v543
  %946 = vmatmul.mubr.bf16.gmra.mrb[0].mxu0 %v542
  %v947 = vpop.f32.mrb[0].mxu0
  %v948 = vadd.f32 %v199, %v947
  %v949 = vpop.f32.mrb[0].mxu0
  %v950 = vpop.f32.mrb[0].mxu0
  %v951 = vadd.f32 %v199, %v950
  %v952 = vpop.f32.mrb[0].mxu0
  %953 = vmatprep.mubr.bf16.mxu0 %v546
  %954 = vmatmul.mubr.bf16.gmra.mrb[0].mxu0 %v545
  %v955 = vpop.f32.mrb[0].mxu0
  %v956 = vadd.f32 %v199, %v955
  %v957 = vpop.f32.mrb[0].mxu0
  %v958 = vpop.f32.mrb[0].mxu0
  %v959 = vadd.f32 %v199, %v958
  %v960 = vpop.f32.mrb[0].mxu0
  %961 = vmatprep.mubr.bf16.mxu0 %v549
  %962 = vmatmul.mubr.bf16.gmra.mrb[0].mxu0 %v548
  %v963 = vpop.f32.mrb[0].mxu0
  %v964 = vadd.f32 %v199, %v963
  %v965 = vpop.f32.mrb[0].mxu0
  %v966 = vpop.f32.mrb[0].mxu0
  %v967 = vadd.f32 %v199, %v966
  %v968 = vpop.f32.mrb[0].mxu0
  %969 = vmatprep.mubr.bf16.mxu0 %v552
  %970 = vmatmul.mubr.bf16.gmra.mrb[0].mxu0 %v551
  %v971 = vpop.f32.mrb[0].mxu0
  %v972 = vadd.f32 %v199, %v971
  %v973 = vpop.f32.mrb[0].mxu0
  %v974 = vpop.f32.mrb[0].mxu0
  %v975 = vadd.f32 %v199, %v974
  %v976 = vpop.f32.mrb[0].mxu0
  %977 = vmatprep.mubr.bf16.mxu0 %v555
  %978 = vmatmul.mubr.bf16.gmra.mrb[0].mxu0 %v554
  %v979 = vpop.f32.mrb[0].mxu0
  %v980 = vadd.f32 %v199, %v979
  %v981 = vpop.f32.mrb[0].mxu0
  %v982 = vpop.f32.mrb[0].mxu0
  %v983 = vadd.f32 %v199, %v982
  %v984 = vpop.f32.mrb[0].mxu0
  %985 = vmatprep.mubr.bf16.mxu0 %v558
  %986 = vmatmul.mubr.bf16.gmra.mrb[0].mxu0 %v557
  %v987 = vpop.f32.mrb[0].mxu0
  %v988 = vadd.f32 %v199, %v987
  %v989 = vpop.f32.mrb[0].mxu0
  %v990 = vpop.f32.mrb[0].mxu0
  %v991 = vadd.f32 %v199, %v990
  %v992 = vpop.f32.mrb[0].mxu0
  %993 = vmatprep.mubr.bf16.mxu0 %v561
  %994 = vmatmul.mubr.bf16.gmra.mrb[0].mxu0 %v560
  %v995 = vpop.f32.mrb[0].mxu0
  %v996 = vadd.f32 %v199, %v995
  %v997 = vpop.f32.mrb[0].mxu0
  %v998 = vpop.f32.mrb[0].mxu0
  %v999 = vadd.f32 %v199, %v998
  %v1000 = vpop.f32.mrb[0].mxu0
  %1001 = vmatprep.mubr.bf16.mxu0 %v564
  %1002 = vmatmul.mubr.bf16.gmra.mrb[0].mxu0 %v563
  %v1003 = vpop.f32.mrb[0].mxu0
  %v1004 = vadd.f32 %v199, %v1003
  %v1005 = vpop.f32.mrb[0].mxu0
  %v1006 = vpop.f32.mrb[0].mxu0
  %v1007 = vadd.f32 %v199, %v1006
  %v1008 = vpop.f32.mrb[0].mxu0
  %1009 = vmatprep.mubr.bf16.mxu0 %v567
  %1010 = vmatmul.mubr.bf16.gmra.mrb[0].mxu0 %v566
  %v1011 = vpop.f32.mrb[0].mxu0
  %v1012 = vadd.f32 %v199, %v1011
  %v1013 = vpop.f32.mrb[0].mxu0
  %v1014 = vpop.f32.mrb[0].mxu0
  %v1015 = vadd.f32 %v199, %v1014
  %v1016 = vpop.f32.mrb[0].mxu0
  %1017 = vmatprep.mubr.bf16.mxu0 %v570
  %1018 = vmatmul.mubr.bf16.gmra.mrb[0].mxu0 %v569
  %v1019 = vpop.f32.mrb[0].mxu0
  %v1020 = vadd.f32 %v199, %v1019
  %v1021 = vpop.f32.mrb[0].mxu0
  %v1022 = vpop.f32.mrb[0].mxu0
  %v1023 = vadd.f32 %v199, %v1022
  %v1024 = vpop.f32.mrb[0].mxu0
  %1025 = vmatprep.mubr.bf16.mxu0 %v573
  %1026 = vmatmul.mubr.bf16.gmra.mrb[0].mxu0 %v572
  %v1027 = vpop.f32.mrb[0].mxu0
  %v1028 = vadd.f32 %v199, %v1027
  %v1029 = vpop.f32.mrb[0].mxu0
  %v1030 = vpop.f32.mrb[0].mxu0
  %v1031 = vadd.f32 %v199, %v1030
  %v1032 = vpop.f32.mrb[0].mxu0
  %1033 = vmatprep.mubr.bf16.mxu0 %v576
  %1034 = vmatmul.mubr.bf16.gmra.mrb[0].mxu0 %v575
  %v1035 = vpop.f32.mrb[0].mxu0
  %v1036 = vadd.f32 %v199, %v1035
  %v1037 = vpop.f32.mrb[0].mxu0
  %v1038 = vpop.f32.mrb[0].mxu0
  %v1039 = vadd.f32 %v199, %v1038
  %v1040 = vpop.f32.mrb[0].mxu0
  %1041 = vmatprep.mubr.bf16.mxu0 %v579
  %1042 = vmatmul.mubr.bf16.gmra.mrb[0].mxu0 %v578
  %v1043 = vpop.f32.mrb[0].mxu0
  %v1044 = vadd.f32 %v199, %v1043
  %v1045 = vpop.f32.mrb[0].mxu0
  %v1046 = vpop.f32.mrb[0].mxu0
  %v1047 = vadd.f32 %v199, %v1046
  %v1048 = vpop.f32.mrb[0].mxu0
  %1049 = vmatprep.mubr.bf16.mxu0 %v582
  %1050 = vmatmul.mubr.bf16.gmra.mrb[0].mxu0 %v581
  %v1051 = vpop.f32.mrb[0].mxu0
  %v1052 = vadd.f32 %v199, %v1051
  %v1053 = vpop.f32.mrb[0].mxu0
  %v1054 = vpop.f32.mrb[0].mxu0
  %v1055 = vadd.f32 %v199, %v1054
  %v1056 = vpop.f32.mrb[0].mxu0
  %1057 = vmatprep.mubr.bf16.mxu0 %v585
  %1058 = vmatmul.mubr.bf16.gmra.mrb[0].mxu0 %v584
  %v1059 = vpop.f32.mrb[0].mxu0
  %v1060 = vadd.f32 %v199, %v1059
  %v1061 = vpop.f32.mrb[0].mxu0
  %v1062 = vpop.f32.mrb[0].mxu0
  %v1063 = vadd.f32 %v199, %v1062
  %v1064 = vpop.f32.mrb[0].mxu0
  %1065 = vmatprep.mubr.bf16.mxu0 %v588
  %1066 = vmatmul.mubr.bf16.gmra.mrb[0].mxu0 %v587
  %v1067 = vpop.f32.mrb[0].mxu0
  %v1068 = vadd.f32 %v199, %v1067
  %v1069 = vpop.f32.mrb[0].mxu0
  %v1070 = vpop.f32.mrb[0].mxu0
  %v1071 = vadd.f32 %v199, %v1070
  %v1072 = vpop.f32.mrb[0].mxu0
  %1073 = vmatprep.mubr.bf16.mxu0 %v591
  %1074 = vmatmul.mubr.bf16.gmra.mrb[0].mxu0 %v590
  %v1075 = vpop.f32.mrb[0].mxu0
  %v1076 = vadd.f32 %v199, %v1075
  %v1077 = vpop.f32.mrb[0].mxu0
  %v1078 = vpop.f32.mrb[0].mxu0
  %v1079 = vadd.f32 %v199, %v1078
  %v1080 = vpop.f32.mrb[0].mxu0
  %1081 = vmatprep.mubr.bf16.mxu0 %v594
  %1082 = vmatmul.mubr.bf16.gmra.mrb[0].mxu0 %v593
  %v1083 = vpop.f32.mrb[0].mxu0
  %v1084 = vadd.f32 %v199, %v1083
  %v1085 = vpop.f32.mrb[0].mxu0
  %v1086 = vpop.f32.mrb[0].mxu0
  %v1087 = vadd.f32 %v199, %v1086
  %v1088 = vpop.f32.mrb[0].mxu0
  %1089 = vmatprep.mubr.bf16.mxu0 %v597
  %1090 = vmatmul.mubr.bf16.gmra.mrb[0].mxu0 %v596
  %v1091 = vpop.f32.mrb[0].mxu0
  %v1092 = vadd.f32 %v199, %v1091
  %v1093 = vpop.f32.mrb[0].mxu0
  %v1094 = vpop.f32.mrb[0].mxu0
  %v1095 = vadd.f32 %v199, %v1094
  %v1096 = vpop.f32.mrb[0].mxu0
  %1097 = vmatprep.mubr.bf16.mxu0 %v600
  %1098 = vmatmul.mubr.bf16.gmra.mrb[0].mxu0 %v599
  %v1099 = vpop.f32.mrb[0].mxu0
  %v1100 = vadd.f32 %v199, %v1099
  %v1101 = vpop.f32.mrb[0].mxu0
  %v1102 = vpop.f32.mrb[0].mxu0
  %v1103 = vadd.f32 %v199, %v1102
  %v1104 = vpop.f32.mrb[0].mxu0
  %1105 = vmatprep.mubr.bf16.mxu0 %v603
  %1106 = vmatmul.mubr.bf16.gmra.mrb[0].mxu0 %v602
  %v1107 = vpop.f32.mrb[0].mxu0
  %v1108 = vadd.f32 %v199, %v1107
  %v1109 = vpop.f32.mrb[0].mxu0
  %v1110 = vpop.f32.mrb[0].mxu0
  %v1111 = vadd.f32 %v199, %v1110
  %v1112 = vpop.f32.mrb[0].mxu0
  %1113 = vmatprep.mubr.bf16.mxu0 %v606
  %1114 = vmatmul.mubr.bf16.gmra.mrb[0].mxu0 %v605
  %v1115 = vpop.f32.mrb[0].mxu0
  %v1116 = vadd.f32 %v199, %v1115
  %v1117 = vpop.f32.mrb[0].mxu0
  %v1118 = vpop.f32.mrb[0].mxu0
  %v1119 = vadd.f32 %v199, %v1118
  %v1120 = vpop.f32.mrb[0].mxu0
  %1121 = vmatprep.mubr.bf16.mxu0 %v609
  %1122 = vmatmul.mubr.bf16.gmra.mrb[0].mxu0 %v608
  %v1123 = vpop.f32.mrb[0].mxu0
  %v1124 = vadd.f32 %v199, %v1123
  %v1125 = vpop.f32.mrb[0].mxu0
  %v1126 = vpop.f32.mrb[0].mxu0
  %v1127 = vadd.f32 %v199, %v1126
  %v1128 = vpop.f32.mrb[0].mxu0
  %1129 = vmatprep.mubr.bf16.mxu0 %v612
  %1130 = vmatmul.mubr.bf16.gmra.mrb[0].mxu0 %v611
  %v1131 = vpop.f32.mrb[0].mxu0
  %v1132 = vadd.f32 %v199, %v1131
  %v1133 = vpop.f32.mrb[0].mxu0
  %v1134 = vpop.f32.mrb[0].mxu0
  %v1135 = vadd.f32 %v199, %v1134
  %v1136 = vpop.f32.mrb[0].mxu0
  %1137 = vmatprep.mubr.bf16.mxu0 %v615
  %1138 = vmatmul.mubr.bf16.gmra.mrb[0].mxu0 %v614
  %v1139 = vpop.f32.mrb[0].mxu0
  %v1140 = vadd.f32 %v199, %v1139
  %v1141 = vpop.f32.mrb[0].mxu0
  %v1142 = vpop.f32.mrb[0].mxu0
  %v1143 = vadd.f32 %v199, %v1142
  %v1144 = vpop.f32.mrb[0].mxu0
  %1145 = vdwg.mxu0
  %1146 = vmatprep.subr.bf16.mxu0 0
  %1147 = vmatpush1.bf16.msra.mxu0 %v825
  %1148 = vmatprep.subr.bf16.mxu0 0
  %1149 = vmatpush1.bf16.msra.mxu0 %v826
  %1150 = vmatprep.subr.bf16.mxu0 0
  %1151 = vmatpush1.bf16.msra.mxu0 %v827
  %1152 = vmatprep.subr.bf16.mxu0 0
  %1153 = vmatpush1.bf16.msra.mxu0 %v828
  %1154 = vmatprep.subr.bf16.mxu0 0
  %1155 = vmatpush1.bf16.msra.mxu0 %v829
  %1156 = vmatprep.subr.bf16.mxu0 0
  %1157 = vmatpush1.bf16.msra.mxu0 %v830
  %1158 = vmatprep.subr.bf16.mxu0 0
  %1159 = vmatpush1.bf16.msra.mxu0 %v831
  %1160 = vmatprep.subr.bf16.mxu0 0
  %1161 = vmatpush1.bf16.msra.mxu0 %v832
  %1162 = vmatprep.subr.bf16.mxu0 0
  %1163 = vmatpush1.bf16.msra.mxu0 0
  %1164 = vmatprep.subr.bf16.mxu0 0
  %1165 = vmatpush1.bf16.msra.mxu0 0
  %1166 = vmatprep.subr.bf16.mxu0 0
  %1167 = vmatpush1.bf16.msra.mxu0 0
  %1168 = vmatprep.subr.bf16.mxu0 0
  %1169 = vmatpush1.bf16.msra.mxu0 0
  %1170 = vmatprep.subr.bf16.mxu0 0
  %1171 = vmatpush1.bf16.msra.mxu0 0
  %1172 = vmatprep.subr.bf16.mxu0 0
  %1173 = vmatpush1.bf16.msra.mxu0 0
  %1174 = vmatprep.subr.bf16.mxu0 0
  %1175 = vmatpush1.bf16.msra.mxu0 0
  %1176 = vmatprep.subr.bf16.mxu0 0
  %1177 = vmatpush1.bf16.msra.mxu0 0
  %1178 = vmatprep.mubr.bf16.mxu0 0
  %1179 = vmatmul.mubr.bf16.gmra.mrb[0].mxu0 %v523
  %v1180 = vpop.f32.mrb[0].mxu0
  %v1181 = vadd.f32 %v892, %v1180
  %v1182 = vpop.f32.mrb[0].mxu0
  %v1183 = vpop.f32.mrb[0].mxu0
  %v1184 = vadd.f32 %v895, %v1183
  %v1185 = vpop.f32.mrb[0].mxu0
  %1186 = vmatprep.mubr.bf16.mxu0 0
  %1187 = vmatmul.mubr.bf16.gmra.mrb[0].mxu0 %v526
  %v1188 = vpop.f32.mrb[0].mxu0
  %v1189 = vadd.f32 %v900, %v1188
  %v1190 = vpop.f32.mrb[0].mxu0
  %v1191 = vpop.f32.mrb[0].mxu0
  %v1192 = vadd.f32 %v903, %v1191
  %v1193 = vpop.f32.mrb[0].mxu0
  %1194 = vmatprep.mubr.bf16.mxu0 0
  %1195 = vmatmul.mubr.bf16.gmra.mrb[0].mxu0 %v529
  %v1196 = vpop.f32.mrb[0].mxu0
  %v1197 = vadd.f32 %v908, %v1196
  %v1198 = vpop.f32.mrb[0].mxu0
  %v1199 = vpop.f32.mrb[0].mxu0
  %v1200 = vadd.f32 %v911, %v1199
  %v1201 = vpop.f32.mrb[0].mxu0
  %1202 = vmatprep.mubr.bf16.mxu0 0
  %1203 = vmatmul.mubr.bf16.gmra.mrb[0].mxu0 %v532
  %v1204 = vpop.f32.mrb[0].mxu0
  %v1205 = vadd.f32 %v916, %v1204
  %v1206 = vpop.f32.mrb[0].mxu0
  %v1207 = vpop.f32.mrb[0].mxu0
  %v1208 = vadd.f32 %v919, %v1207
  %v1209 = vpop.f32.mrb[0].mxu0
  %1210 = vmatprep.mubr.bf16.mxu0 0
  %1211 = vmatmul.mubr.bf16.gmra.mrb[0].mxu0 %v535
  %v1212 = vpop.f32.mrb[0].mxu0
  %v1213 = vadd.f32 %v924, %v1212
  %v1214 = vpop.f32.mrb[0].mxu0
  %v1215 = vpop.f32.mrb[0].mxu0
  %v1216 = vadd.f32 %v927, %v1215
  %v1217 = vpop.f32.mrb[0].mxu0
  %1218 = vmatprep.mubr.bf16.mxu0 0
  %1219 = vmatmul.mubr.bf16.gmra.mrb[0].mxu0 %v538
  %v1220 = vpop.f32.mrb[0].mxu0
  %v1221 = vadd.f32 %v932, %v1220
  %v1222 = vpop.f32.mrb[0].mxu0
  %v1223 = vpop.f32.mrb[0].mxu0
  %v1224 = vadd.f32 %v935, %v1223
  %v1225 = vpop.f32.mrb[0].mxu0
  %1226 = vmatprep.mubr.bf16.mxu0 0
  %1227 = vmatmul.mubr.bf16.gmra.mrb[0].mxu0 %v541
  %v1228 = vpop.f32.mrb[0].mxu0
  %v1229 = vadd.f32 %v940, %v1228
  %v1230 = vpop.f32.mrb[0].mxu0
  %v1231 = vpop.f32.mrb[0].mxu0
  %v1232 = vadd.f32 %v943, %v1231
  %v1233 = vpop.f32.mrb[0].mxu0
  %1234 = vmatprep.mubr.bf16.mxu0 0
  %1235 = vmatmul.mubr.bf16.gmra.mrb[0].mxu0 %v544
  %v1236 = vpop.f32.mrb[0].mxu0
  %v1237 = vadd.f32 %v948, %v1236
  %v1238 = vpop.f32.mrb[0].mxu0
  %v1239 = vpop.f32.mrb[0].mxu0
  %v1240 = vadd.f32 %v951, %v1239
  %v1241 = vpop.f32.mrb[0].mxu0
  %1242 = vmatprep.mubr.bf16.mxu0 0
  %1243 = vmatmul.mubr.bf16.gmra.mrb[0].mxu0 %v547
  %v1244 = vpop.f32.mrb[0].mxu0
  %v1245 = vadd.f32 %v956, %v1244
  %v1246 = vpop.f32.mrb[0].mxu0
  %v1247 = vpop.f32.mrb[0].mxu0
  %v1248 = vadd.f32 %v959, %v1247
  %v1249 = vpop.f32.mrb[0].mxu0
  %1250 = vmatprep.mubr.bf16.mxu0 0
  %1251 = vmatmul.mubr.bf16.gmra.mrb[0].mxu0 %v550
  %v1252 = vpop.f32.mrb[0].mxu0
  %v1253 = vadd.f32 %v964, %v1252
  %v1254 = vpop.f32.mrb[0].mxu0
  %v1255 = vpop.f32.mrb[0].mxu0
  %v1256 = vadd.f32 %v967, %v1255
  %v1257 = vpop.f32.mrb[0].mxu0
  %1258 = vmatprep.mubr.bf16.mxu0 0
  %1259 = vmatmul.mubr.bf16.gmra.mrb[0].mxu0 %v553
  %v1260 = vpop.f32.mrb[0].mxu0
  %v1261 = vadd.f32 %v972, %v1260
  %v1262 = vpop.f32.mrb[0].mxu0
  %v1263 = vpop.f32.mrb[0].mxu0
  %v1264 = vadd.f32 %v975, %v1263
  %v1265 = vpop.f32.mrb[0].mxu0
  %1266 = vmatprep.mubr.bf16.mxu0 0
  %1267 = vmatmul.mubr.bf16.gmra.mrb[0].mxu0 %v556
  %v1268 = vpop.f32.mrb[0].mxu0
  %v1269 = vadd.f32 %v980, %v1268
  %v1270 = vpop.f32.mrb[0].mxu0
  %v1271 = vpop.f32.mrb[0].mxu0
  %v1272 = vadd.f32 %v983, %v1271
  %v1273 = vpop.f32.mrb[0].mxu0
  %1274 = vmatprep.mubr.bf16.mxu0 0
  %1275 = vmatmul.mubr.bf16.gmra.mrb[0].mxu0 %v559
  %v1276 = vpop.f32.mrb[0].mxu0
  %v1277 = vadd.f32 %v988, %v1276
  %v1278 = vpop.f32.mrb[0].mxu0
  %v1279 = vpop.f32.mrb[0].mxu0
  %v1280 = vadd.f32 %v991, %v1279
  %v1281 = vpop.f32.mrb[0].mxu0
  %1282 = vmatprep.mubr.bf16.mxu0 0
  %1283 = vmatmul.mubr.bf16.gmra.mrb[0].mxu0 %v562
  %v1284 = vpop.f32.mrb[0].mxu0
  %v1285 = vadd.f32 %v996, %v1284
  %v1286 = vpop.f32.mrb[0].mxu0
  %v1287 = vpop.f32.mrb[0].mxu0
  %v1288 = vadd.f32 %v999, %v1287
  %v1289 = vpop.f32.mrb[0].mxu0
  %1290 = vmatprep.mubr.bf16.mxu0 0
  %1291 = vmatmul.mubr.bf16.gmra.mrb[0].mxu0 %v565
  %v1292 = vpop.f32.mrb[0].mxu0
  %v1293 = vadd.f32 %v1004, %v1292
  %v1294 = vpop.f32.mrb[0].mxu0
  %v1295 = vpop.f32.mrb[0].mxu0
  %v1296 = vadd.f32 %v1007, %v1295
  %v1297 = vpop.f32.mrb[0].mxu0
  %1298 = vmatprep.mubr.bf16.mxu0 0
  %1299 = vmatmul.mubr.bf16.gmra.mrb[0].mxu0 %v568
  %v1300 = vpop.f32.mrb[0].mxu0
  %v1301 = vadd.f32 %v1012, %v1300
  %v1302 = vpop.f32.mrb[0].mxu0
  %v1303 = vpop.f32.mrb[0].mxu0
  %v1304 = vadd.f32 %v1015, %v1303
  %v1305 = vpop.f32.mrb[0].mxu0
  %1306 = vmatprep.mubr.bf16.mxu0 0
  %1307 = vmatmul.mubr.bf16.gmra.mrb[0].mxu0 %v571
  %v1308 = vpop.f32.mrb[0].mxu0
  %v1309 = vadd.f32 %v1020, %v1308
  %v1310 = vpop.f32.mrb[0].mxu0
  %v1311 = vpop.f32.mrb[0].mxu0
  %v1312 = vadd.f32 %v1023, %v1311
  %v1313 = vpop.f32.mrb[0].mxu0
  %1314 = vmatprep.mubr.bf16.mxu0 0
  %1315 = vmatmul.mubr.bf16.gmra.mrb[0].mxu0 %v574
  %v1316 = vpop.f32.mrb[0].mxu0
  %v1317 = vadd.f32 %v1028, %v1316
  %v1318 = vpop.f32.mrb[0].mxu0
  %v1319 = vpop.f32.mrb[0].mxu0
  %v1320 = vadd.f32 %v1031, %v1319
  %v1321 = vpop.f32.mrb[0].mxu0
  %1322 = vmatprep.mubr.bf16.mxu0 0
  %1323 = vmatmul.mubr.bf16.gmra.mrb[0].mxu0 %v577
  %v1324 = vpop.f32.mrb[0].mxu0
  %v1325 = vadd.f32 %v1036, %v1324
  %v1326 = vpop.f32.mrb[0].mxu0
  %v1327 = vpop.f32.mrb[0].mxu0
  %v1328 = vadd.f32 %v1039, %v1327
  %v1329 = vpop.f32.mrb[0].mxu0
  %1330 = vmatprep.mubr.bf16.mxu0 0
  %1331 = vmatmul.mubr.bf16.gmra.mrb[0].mxu0 %v580
  %v1332 = vpop.f32.mrb[0].mxu0
  %v1333 = vadd.f32 %v1044, %v1332
  %v1334 = vpop.f32.mrb[0].mxu0
  %v1335 = vpop.f32.mrb[0].mxu0
  %v1336 = vadd.f32 %v1047, %v1335
  %v1337 = vpop.f32.mrb[0].mxu0
  %1338 = vmatprep.mubr.bf16.mxu0 0
  %1339 = vmatmul.mubr.bf16.gmra.mrb[0].mxu0 %v583
  %v1340 = vpop.f32.mrb[0].mxu0
  %v1341 = vadd.f32 %v1052, %v1340
  %v1342 = vpop.f32.mrb[0].mxu0
  %v1343 = vpop.f32.mrb[0].mxu0
  %v1344 = vadd.f32 %v1055, %v1343
  %v1345 = vpop.f32.mrb[0].mxu0
  %1346 = vmatprep.mubr.bf16.mxu0 0
  %1347 = vmatmul.mubr.bf16.gmra.mrb[0].mxu0 %v586
  %v1348 = vpop.f32.mrb[0].mxu0
  %v1349 = vadd.f32 %v1060, %v1348
  %v1350 = vpop.f32.mrb[0].mxu0
  %v1351 = vpop.f32.mrb[0].mxu0
  %v1352 = vadd.f32 %v1063, %v1351
  %v1353 = vpop.f32.mrb[0].mxu0
  %1354 = vmatprep.mubr.bf16.mxu0 0
  %1355 = vmatmul.mubr.bf16.gmra.mrb[0].mxu0 %v589
  %v1356 = vpop.f32.mrb[0].mxu0
  %v1357 = vadd.f32 %v1068, %v1356
  %v1358 = vpop.f32.mrb[0].mxu0
  %v1359 = vpop.f32.mrb[0].mxu0
  %v1360 = vadd.f32 %v1071, %v1359
  %v1361 = vpop.f32.mrb[0].mxu0
  %1362 = vmatprep.mubr.bf16.mxu0 0
  %1363 = vmatmul.mubr.bf16.gmra.mrb[0].mxu0 %v592
  %v1364 = vpop.f32.mrb[0].mxu0
  %v1365 = vadd.f32 %v1076, %v1364
  %v1366 = vpop.f32.mrb[0].mxu0
  %v1367 = vpop.f32.mrb[0].mxu0
  %v1368 = vadd.f32 %v1079, %v1367
  %v1369 = vpop.f32.mrb[0].mxu0
  %1370 = vmatprep.mubr.bf16.mxu0 0
  %1371 = vmatmul.mubr.bf16.gmra.mrb[0].mxu0 %v595
  %v1372 = vpop.f32.mrb[0].mxu0
  %v1373 = vadd.f32 %v1084, %v1372
  %v1374 = vpop.f32.mrb[0].mxu0
  %v1375 = vpop.f32.mrb[0].mxu0
  %v1376 = vadd.f32 %v1087, %v1375
  %v1377 = vpop.f32.mrb[0].mxu0
  %1378 = vmatprep.mubr.bf16.mxu0 0
  %1379 = vmatmul.mubr.bf16.gmra.mrb[0].mxu0 %v598
  %v1380 = vpop.f32.mrb[0].mxu0
  %v1381 = vadd.f32 %v1092, %v1380
  %v1382 = vpop.f32.mrb[0].mxu0
  %v1383 = vpop.f32.mrb[0].mxu0
  %v1384 = vadd.f32 %v1095, %v1383
  %v1385 = vpop.f32.mrb[0].mxu0
  %1386 = vmatprep.mubr.bf16.mxu0 0
  %1387 = vmatmul.mubr.bf16.gmra.mrb[0].mxu0 %v601
  %v1388 = vpop.f32.mrb[0].mxu0
  %v1389 = vadd.f32 %v1100, %v1388
  %v1390 = vpop.f32.mrb[0].mxu0
  %v1391 = vpop.f32.mrb[0].mxu0
  %v1392 = vadd.f32 %v1103, %v1391
  %v1393 = vpop.f32.mrb[0].mxu0
  %1394 = vmatprep.mubr.bf16.mxu0 0
  %1395 = vmatmul.mubr.bf16.gmra.mrb[0].mxu0 %v604
  %v1396 = vpop.f32.mrb[0].mxu0
  %v1397 = vadd.f32 %v1108, %v1396
  %v1398 = vpop.f32.mrb[0].mxu0
  %v1399 = vpop.f32.mrb[0].mxu0
  %v1400 = vadd.f32 %v1111, %v1399
  %v1401 = vpop.f32.mrb[0].mxu0
  %1402 = vmatprep.mubr.bf16.mxu0 0
  %1403 = vmatmul.mubr.bf16.gmra.mrb[0].mxu0 %v607
  %v1404 = vpop.f32.mrb[0].mxu0
  %v1405 = vadd.f32 %v1116, %v1404
  %v1406 = vpop.f32.mrb[0].mxu0
  %v1407 = vpop.f32.mrb[0].mxu0
  %v1408 = vadd.f32 %v1119, %v1407
  %v1409 = vpop.f32.mrb[0].mxu0
  %1410 = vmatprep.mubr.bf16.mxu0 0
  %1411 = vmatmul.mubr.bf16.gmra.mrb[0].mxu0 %v610
  %v1412 = vpop.f32.mrb[0].mxu0
  %v1413 = vadd.f32 %v1124, %v1412
  %v1414 = vpop.f32.mrb[0].mxu0
  %v1415 = vpop.f32.mrb[0].mxu0
  %v1416 = vadd.f32 %v1127, %v1415
  %v1417 = vpop.f32.mrb[0].mxu0
  %1418 = vmatprep.mubr.bf16.mxu0 0
  %1419 = vmatmul.mubr.bf16.gmra.mrb[0].mxu0 %v613
  %v1420 = vpop.f32.mrb[0].mxu0
  %v1421 = vadd.f32 %v1132, %v1420
  %v1422 = vpop.f32.mrb[0].mxu0
  %v1423 = vpop.f32.mrb[0].mxu0
  %v1424 = vadd.f32 %v1135, %v1423
  %v1425 = vpop.f32.mrb[0].mxu0
  %1426 = vmatprep.mubr.bf16.mxu0 0
  %1427 = vmatmul.mubr.bf16.gmra.mrb[0].mxu0 %v616
  %v1428 = vpop.f32.mrb[0].mxu0
  %v1429 = vadd.f32 %v1140, %v1428
  %v1430 = vpop.f32.mrb[0].mxu0
  %v1431 = vpop.f32.mrb[0].mxu0
  %v1432 = vadd.f32 %v1143, %v1431
  %v1433 = vpop.f32.mrb[0].mxu0
  %1434 = vdwg.mxu0
  %v1435 = vxor.u32 %v1181, 2147483648
  %v1436 = vxor.u32 %v1184, 2147483648
  %v1437 = vxor.u32 %v1189, 2147483648
  %v1438 = vxor.u32 %v1192, 2147483648
  %v1439 = vxor.u32 %v1197, 2147483648
  %v1440 = vxor.u32 %v1200, 2147483648
  %v1441 = vxor.u32 %v1205, 2147483648
  %v1442 = vxor.u32 %v1208, 2147483648
  %v1443 = vxor.u32 %v1213, 2147483648
  %v1444 = vxor.u32 %v1216, 2147483648
  %v1445 = vxor.u32 %v1221, 2147483648
  %v1446 = vxor.u32 %v1224, 2147483648
  %v1447 = vxor.u32 %v1229, 2147483648
  %v1448 = vxor.u32 %v1232, 2147483648
  %v1449 = vxor.u32 %v1237, 2147483648
  %v1450 = vxor.u32 %v1240, 2147483648
  %v1451 = vmul.f32 %v1435, 1.442695
  %v1452 = vpow.pop %v1451
  %v1453 = vmul.f32 %v1436, 1.442695
  %v1454 = vpow.pop %v1453
  %v1455 = vmul.f32 %v1437, 1.442695
  %v1456 = vpow.pop %v1455
  %v1457 = vmul.f32 %v1438, 1.442695
  %v1458 = vpow.pop %v1457
  %v1459 = vmul.f32 %v1439, 1.442695
  %v1460 = vpow.pop %v1459
  %v1461 = vmul.f32 %v1440, 1.442695
  %v1462 = vpow.pop %v1461
  %v1463 = vmul.f32 %v1441, 1.442695
  %v1464 = vpow.pop %v1463
  %v1465 = vmul.f32 %v1442, 1.442695
  %v1466 = vpow.pop %v1465
  %v1467 = vmul.f32 %v1443, 1.442695
  %v1468 = vpow.pop %v1467
  %v1469 = vmul.f32 %v1444, 1.442695
  %v1470 = vpow.pop %v1469
  %v1471 = vmul.f32 %v1445, 1.442695
  %v1472 = vpow.pop %v1471
  %v1473 = vmul.f32 %v1446, 1.442695
  %v1474 = vpow.pop %v1473
  %v1475 = vmul.f32 %v1447, 1.442695
  %v1476 = vpow.pop %v1475
  %v1477 = vmul.f32 %v1448, 1.442695
  %v1478 = vpow.pop %v1477
  %v1479 = vmul.f32 %v1449, 1.442695
  %v1480 = vpow.pop %v1479
  %v1481 = vmul.f32 %v1450, 1.442695
  %v1482 = vpow.pop %v1481
  %v1483 = vadd.f32 %v1452, 1.0
  %v1484 = vadd.f32 %v1454, 1.0
  %v1485 = vadd.f32 %v1456, 1.0
  %v1486 = vadd.f32 %v1458, 1.0
  %v1487 = vadd.f32 %v1460, 1.0
  %v1488 = vadd.f32 %v1462, 1.0
  %v1489 = vadd.f32 %v1464, 1.0
  %v1490 = vadd.f32 %v1466, 1.0
  %v1491 = vadd.f32 %v1468, 1.0
  %v1492 = vadd.f32 %v1470, 1.0
  %v1493 = vadd.f32 %v1472, 1.0
  %v1494 = vadd.f32 %v1474, 1.0
  %v1495 = vadd.f32 %v1476, 1.0
  %v1496 = vadd.f32 %v1478, 1.0
  %v1497 = vadd.f32 %v1480, 1.0
  %v1498 = vadd.f32 %v1482, 1.0
  %v1499 = vrcp.pop %v1483
  %v1500 = vmul.f32 1.0, %v1499
  %v1501 = vrcp.pop %v1484
  %v1502 = vmul.f32 1.0, %v1501
  %v1503 = vrcp.pop %v1485
  %v1504 = vmul.f32 1.0, %v1503
  %v1505 = vrcp.pop %v1486
  %v1506 = vmul.f32 1.0, %v1505
  %v1507 = vrcp.pop %v1487
  %v1508 = vmul.f32 1.0, %v1507
  %v1509 = vrcp.pop %v1488
  %v1510 = vmul.f32 1.0, %v1509
  %v1511 = vrcp.pop %v1489
  %v1512 = vmul.f32 1.0, %v1511
  %v1513 = vrcp.pop %v1490
  %v1514 = vmul.f32 1.0, %v1513
  %v1515 = vrcp.pop %v1491
  %v1516 = vmul.f32 1.0, %v1515
  %v1517 = vrcp.pop %v1492
  %v1518 = vmul.f32 1.0, %v1517
  %v1519 = vrcp.pop %v1493
  %v1520 = vmul.f32 1.0, %v1519
  %v1521 = vrcp.pop %v1494
  %v1522 = vmul.f32 1.0, %v1521
  %v1523 = vrcp.pop %v1495
  %v1524 = vmul.f32 1.0, %v1523
  %v1525 = vrcp.pop %v1496
  %v1526 = vmul.f32 1.0, %v1525
  %v1527 = vrcp.pop %v1497
  %v1528 = vmul.f32 1.0, %v1527
  %v1529 = vrcp.pop %v1498
  %v1530 = vmul.f32 1.0, %v1529
  %v1531 = vld [vmem:[%s3] sm:$0xff]
  %v1532 = vld [vmem:[%s3 + $0x8] sm:$0xff]
  %v1533 = vld [vmem:[%s3 + $0x10] sm:$0xff]
  %v1534 = vld [vmem:[%s3 + $0x18] sm:$0xff]
  %v1535 = vld [vmem:[%s3 + $0x20] sm:$0xff]
  %v1536 = vld [vmem:[%s3 + $0x28] sm:$0xff]
  %v1537 = vld [vmem:[%s3 + $0x30] sm:$0xff]
  %v1538 = vld [vmem:[%s3 + $0x38] sm:$0xff]
  %v1539 = vld [vmem:[%s3 + $0x40] sm:$0xff]
  %v1540 = vld [vmem:[%s3 + $0x48] sm:$0xff]
  %v1541 = vld [vmem:[%s3 + $0x50] sm:$0xff]
  %v1542 = vld [vmem:[%s3 + $0x58] sm:$0xff]
  %v1543 = vld [vmem:[%s3 + $0x60] sm:$0xff]
  %v1544 = vld [vmem:[%s3 + $0x68] sm:$0xff]
  %v1545 = vld [vmem:[%s3 + $0x70] sm:$0xff]
  %v1546 = vld [vmem:[%s3 + $0x78] sm:$0xff]
  %1563 = vrot.lane.b32.xlu0 %v1531, 32
  %v1564 = vpop.permute.xlu0 %1563
  %1565 = vrot.lane.b32.xlu0 %v1532, 32
  %v1566 = vpop.permute.xlu0 %1565
  %1567 = vrot.lane.b32.xlu0 %v1533, 32
  %v1568 = vpop.permute.xlu0 %1567
  %1569 = vrot.lane.b32.xlu0 %v1534, 32
  %v1570 = vpop.permute.xlu0 %1569
  %1571 = vrot.lane.b32.xlu0 %v1535, 32
  %v1572 = vpop.permute.xlu0 %1571
  %1573 = vrot.lane.b32.xlu0 %v1536, 32
  %v1574 = vpop.permute.xlu0 %1573
  %1575 = vrot.lane.b32.xlu0 %v1537, 32
  %v1576 = vpop.permute.xlu0 %1575
  %1577 = vrot.lane.b32.xlu0 %v1538, 32
  %v1578 = vpop.permute.xlu0 %1577
  %1579 = vrot.lane.b32.xlu0 %v1539, 32
  %v1580 = vpop.permute.xlu0 %1579
  %1581 = vrot.lane.b32.xlu0 %v1540, 32
  %v1582 = vpop.permute.xlu0 %1581
  %1583 = vrot.lane.b32.xlu0 %v1541, 32
  %v1584 = vpop.permute.xlu0 %1583
  %1585 = vrot.lane.b32.xlu0 %v1542, 32
  %v1586 = vpop.permute.xlu0 %1585
  %1587 = vrot.lane.b32.xlu0 %v1543, 32
  %v1588 = vpop.permute.xlu0 %1587
  %1589 = vrot.lane.b32.xlu0 %v1544, 32
  %v1590 = vpop.permute.xlu0 %1589
  %1591 = vrot.lane.b32.xlu0 %v1545, 32
  %v1592 = vpop.permute.xlu0 %1591
  %1593 = vrot.lane.b32.xlu0 %v1546, 32
  %v1594 = vpop.permute.xlu0 %1593
  %v1611 = vmul.f32 %v1500, %v1564
  %v1612 = vmul.f32 %v1502, %v1566
  %v1613 = vmul.f32 %v1504, %v1568
  %v1614 = vmul.f32 %v1506, %v1570
  %v1615 = vmul.f32 %v1508, %v1572
  %v1616 = vmul.f32 %v1510, %v1574
  %v1617 = vmul.f32 %v1512, %v1576
  %v1618 = vmul.f32 %v1514, %v1578
  %v1619 = vmul.f32 %v1516, %v1580
  %v1620 = vmul.f32 %v1518, %v1582
  %v1621 = vmul.f32 %v1520, %v1584
  %v1622 = vmul.f32 %v1522, %v1586
  %v1623 = vmul.f32 %v1524, %v1588
  %v1624 = vmul.f32 %v1526, %v1590
  %v1625 = vmul.f32 %v1528, %v1592
  %v1626 = vmul.f32 %v1530, %v1594
  %1643 = vrot.lane.b32.xlu0 %v1500, 32
  %v1644 = vpop.permute.xlu0 %1643
  %1645 = vrot.lane.b32.xlu0 %v1502, 32
  %v1646 = vpop.permute.xlu0 %1645
  %1647 = vrot.lane.b32.xlu0 %v1504, 32
  %v1648 = vpop.permute.xlu0 %1647
  %1649 = vrot.lane.b32.xlu0 %v1506, 32
  %v1650 = vpop.permute.xlu0 %1649
  %1651 = vrot.lane.b32.xlu0 %v1508, 32
  %v1652 = vpop.permute.xlu0 %1651
  %1653 = vrot.lane.b32.xlu0 %v1510, 32
  %v1654 = vpop.permute.xlu0 %1653
  %1655 = vrot.lane.b32.xlu0 %v1512, 32
  %v1656 = vpop.permute.xlu0 %1655
  %1657 = vrot.lane.b32.xlu0 %v1514, 32
  %v1658 = vpop.permute.xlu0 %1657
  %1659 = vrot.lane.b32.xlu0 %v1516, 32
  %v1660 = vpop.permute.xlu0 %1659
  %1661 = vrot.lane.b32.xlu0 %v1518, 32
  %v1662 = vpop.permute.xlu0 %1661
  %1663 = vrot.lane.b32.xlu0 %v1520, 32
  %v1664 = vpop.permute.xlu0 %1663
  %1665 = vrot.lane.b32.xlu0 %v1522, 32
  %v1666 = vpop.permute.xlu0 %1665
  %1667 = vrot.lane.b32.xlu0 %v1524, 32
  %v1668 = vpop.permute.xlu0 %1667
  %1669 = vrot.lane.b32.xlu0 %v1526, 32
  %v1670 = vpop.permute.xlu0 %1669
  %1671 = vrot.lane.b32.xlu0 %v1528, 32
  %v1672 = vpop.permute.xlu0 %1671
  %1673 = vrot.lane.b32.xlu0 %v1530, 32
  %v1674 = vpop.permute.xlu0 %1673
  %v1691 = vmul.f32 %v1500, %v1644
  %v1692 = vmul.f32 %v1502, %v1646
  %v1693 = vmul.f32 %v1504, %v1648
  %v1694 = vmul.f32 %v1506, %v1650
  %v1695 = vmul.f32 %v1508, %v1652
  %v1696 = vmul.f32 %v1510, %v1654
  %v1697 = vmul.f32 %v1512, %v1656
  %v1698 = vmul.f32 %v1514, %v1658
  %v1699 = vmul.f32 %v1516, %v1660
  %v1700 = vmul.f32 %v1518, %v1662
  %v1701 = vmul.f32 %v1520, %v1664
  %v1702 = vmul.f32 %v1522, %v1666
  %v1703 = vmul.f32 %v1524, %v1668
  %v1704 = vmul.f32 %v1526, %v1670
  %v1705 = vmul.f32 %v1528, %v1672
  %v1706 = vmul.f32 %v1530, %v1674
  %v1707 = vmul.f32 %v1691, 2.0
  %v1708 = vmul.f32 %v1692, 2.0
  %v1709 = vmul.f32 %v1693, 2.0
  %v1710 = vmul.f32 %v1694, 2.0
  %v1711 = vmul.f32 %v1695, 2.0
  %v1712 = vmul.f32 %v1696, 2.0
  %v1713 = vmul.f32 %v1697, 2.0
  %v1714 = vmul.f32 %v1698, 2.0
  %v1715 = vmul.f32 %v1699, 2.0
  %v1716 = vmul.f32 %v1700, 2.0
  %v1717 = vmul.f32 %v1701, 2.0
  %v1718 = vmul.f32 %v1702, 2.0
  %v1719 = vmul.f32 %v1703, 2.0
  %v1720 = vmul.f32 %v1704, 2.0
  %v1721 = vmul.f32 %v1705, 2.0
  %v1722 = vmul.f32 %v1706, 2.0
  %1739 = vrot.lane.b32.xlu0 %v1707, 32
  %v1740 = vpop.permute.xlu0 %1739
  %1741 = vrot.lane.b32.xlu0 %v1708, 32
  %v1742 = vpop.permute.xlu0 %1741
  %1743 = vrot.lane.b32.xlu0 %v1709, 32
  %v1744 = vpop.permute.xlu0 %1743
  %1745 = vrot.lane.b32.xlu0 %v1710, 32
  %v1746 = vpop.permute.xlu0 %1745
  %1747 = vrot.lane.b32.xlu0 %v1711, 32
  %v1748 = vpop.permute.xlu0 %1747
  %1749 = vrot.lane.b32.xlu0 %v1712, 32
  %v1750 = vpop.permute.xlu0 %1749
  %1751 = vrot.lane.b32.xlu0 %v1713, 32
  %v1752 = vpop.permute.xlu0 %1751
  %1753 = vrot.lane.b32.xlu0 %v1714, 32
  %v1754 = vpop.permute.xlu0 %1753
  %1755 = vrot.lane.b32.xlu0 %v1715, 32
  %v1756 = vpop.permute.xlu0 %1755
  %1757 = vrot.lane.b32.xlu0 %v1716, 32
  %v1758 = vpop.permute.xlu0 %1757
  %1759 = vrot.lane.b32.xlu0 %v1717, 32
  %v1760 = vpop.permute.xlu0 %1759
  %1761 = vrot.lane.b32.xlu0 %v1718, 32
  %v1762 = vpop.permute.xlu0 %1761
  %1763 = vrot.lane.b32.xlu0 %v1719, 32
  %v1764 = vpop.permute.xlu0 %1763
  %1765 = vrot.lane.b32.xlu0 %v1720, 32
  %v1766 = vpop.permute.xlu0 %1765
  %1767 = vrot.lane.b32.xlu0 %v1721, 32
  %v1768 = vpop.permute.xlu0 %1767
  %1769 = vrot.lane.b32.xlu0 %v1722, 32
  %v1770 = vpop.permute.xlu0 %1769
  %v1787 = vadd.f32 %v1611, %v1740
  %v1788 = vadd.f32 %v1612, %v1742
  %v1789 = vadd.f32 %v1613, %v1744
  %v1790 = vadd.f32 %v1614, %v1746
  %v1791 = vadd.f32 %v1615, %v1748
  %v1792 = vadd.f32 %v1616, %v1750
  %v1793 = vadd.f32 %v1617, %v1752
  %v1794 = vadd.f32 %v1618, %v1754
  %v1795 = vadd.f32 %v1619, %v1756
  %v1796 = vadd.f32 %v1620, %v1758
  %v1797 = vadd.f32 %v1621, %v1760
  %v1798 = vadd.f32 %v1622, %v1762
  %v1799 = vadd.f32 %v1623, %v1764
  %v1800 = vadd.f32 %v1624, %v1766
  %v1801 = vadd.f32 %v1625, %v1768
  %v1802 = vadd.f32 %v1626, %v1770
  %v1803 = vsub.f32 %v1787, %v1644
  %v1804 = vsub.f32 %v1788, %v1646
  %v1805 = vsub.f32 %v1789, %v1648
  %v1806 = vsub.f32 %v1790, %v1650
  %v1807 = vsub.f32 %v1791, %v1652
  %v1808 = vsub.f32 %v1792, %v1654
  %v1809 = vsub.f32 %v1793, %v1656
  %v1810 = vsub.f32 %v1794, %v1658
  %v1811 = vsub.f32 %v1795, %v1660
  %v1812 = vsub.f32 %v1796, %v1662
  %v1813 = vsub.f32 %v1797, %v1664
  %v1814 = vsub.f32 %v1798, %v1666
  %v1815 = vsub.f32 %v1799, %v1668
  %v1816 = vsub.f32 %v1800, %v1670
  %v1817 = vsub.f32 %v1801, %v1672
  %v1818 = vsub.f32 %v1802, %v1674
  %v1819 = vtanh.pop %v1803
  %v1820 = vtanh.pop %v1804
  %v1821 = vtanh.pop %v1805
  %v1822 = vtanh.pop %v1806
  %v1823 = vtanh.pop %v1807
  %v1824 = vtanh.pop %v1808
  %v1825 = vtanh.pop %v1809
  %v1826 = vtanh.pop %v1810
  %v1827 = vtanh.pop %v1811
  %v1828 = vtanh.pop %v1812
  %v1829 = vtanh.pop %v1813
  %v1830 = vtanh.pop %v1814
  %v1831 = vtanh.pop %v1815
  %v1832 = vtanh.pop %v1816
  %v1833 = vtanh.pop %v1817
  %v1834 = vtanh.pop %v1818
  %1851 = vrot.lane.b32.xlu0 %v1819, 32
  %v1852 = vpop.permute.xlu0 %1851
  %1853 = vrot.lane.b32.xlu0 %v1820, 32
  %v1854 = vpop.permute.xlu0 %1853
  %1855 = vrot.lane.b32.xlu0 %v1821, 32
  %v1856 = vpop.permute.xlu0 %1855
  %1857 = vrot.lane.b32.xlu0 %v1822, 32
  %v1858 = vpop.permute.xlu0 %1857
  %1859 = vrot.lane.b32.xlu0 %v1823, 32
  %v1860 = vpop.permute.xlu0 %1859
  %1861 = vrot.lane.b32.xlu0 %v1824, 32
  %v1862 = vpop.permute.xlu0 %1861
  %1863 = vrot.lane.b32.xlu0 %v1825, 32
  %v1864 = vpop.permute.xlu0 %1863
  %1865 = vrot.lane.b32.xlu0 %v1826, 32
  %v1866 = vpop.permute.xlu0 %1865
  %1867 = vrot.lane.b32.xlu0 %v1827, 32
  %v1868 = vpop.permute.xlu0 %1867
  %1869 = vrot.lane.b32.xlu0 %v1828, 32
  %v1870 = vpop.permute.xlu0 %1869
  %1871 = vrot.lane.b32.xlu0 %v1829, 32
  %v1872 = vpop.permute.xlu0 %1871
  %1873 = vrot.lane.b32.xlu0 %v1830, 32
  %v1874 = vpop.permute.xlu0 %1873
  %1875 = vrot.lane.b32.xlu0 %v1831, 32
  %v1876 = vpop.permute.xlu0 %1875
  %1877 = vrot.lane.b32.xlu0 %v1832, 32
  %v1878 = vpop.permute.xlu0 %1877
  %1879 = vrot.lane.b32.xlu0 %v1833, 32
  %v1880 = vpop.permute.xlu0 %1879
  %1881 = vrot.lane.b32.xlu0 %v1834, 32
  %v1882 = vpop.permute.xlu0 %1881
  %v1899 = vmul.f32 %v1500, %v1852
  %v1900 = vmul.f32 %v1502, %v1854
  %v1901 = vmul.f32 %v1504, %v1856
  %v1902 = vmul.f32 %v1506, %v1858
  %v1903 = vmul.f32 %v1508, %v1860
  %v1904 = vmul.f32 %v1510, %v1862
  %v1905 = vmul.f32 %v1512, %v1864
  %v1906 = vmul.f32 %v1514, %v1866
  %v1907 = vmul.f32 %v1516, %v1868
  %v1908 = vmul.f32 %v1518, %v1870
  %v1909 = vmul.f32 %v1520, %v1872
  %v1910 = vmul.f32 %v1522, %v1874
  %v1911 = vmul.f32 %v1524, %v1876
  %v1912 = vmul.f32 %v1526, %v1878
  %v1913 = vmul.f32 %v1528, %v1880
  %v1914 = vmul.f32 %v1530, %v1882
  %1931 = vrot.lane.b32.xlu0 %v1899, 64
  %v1932 = vpop.permute.xlu0 %1931
  %1933 = vrot.lane.b32.xlu0 %v1900, 64
  %v1934 = vpop.permute.xlu0 %1933
  %1935 = vrot.lane.b32.xlu0 %v1901, 64
  %v1936 = vpop.permute.xlu0 %1935
  %1937 = vrot.lane.b32.xlu0 %v1902, 64
  %v1938 = vpop.permute.xlu0 %1937
  %1939 = vrot.lane.b32.xlu0 %v1903, 64
  %v1940 = vpop.permute.xlu0 %1939
  %1941 = vrot.lane.b32.xlu0 %v1904, 64
  %v1942 = vpop.permute.xlu0 %1941
  %1943 = vrot.lane.b32.xlu0 %v1905, 64
  %v1944 = vpop.permute.xlu0 %1943
  %1945 = vrot.lane.b32.xlu0 %v1906, 64
  %v1946 = vpop.permute.xlu0 %1945
  %1947 = vrot.lane.b32.xlu0 %v1907, 64
  %v1948 = vpop.permute.xlu0 %1947
  %1949 = vrot.lane.b32.xlu0 %v1908, 64
  %v1950 = vpop.permute.xlu0 %1949
  %1951 = vrot.lane.b32.xlu0 %v1909, 64
  %v1952 = vpop.permute.xlu0 %1951
  %1953 = vrot.lane.b32.xlu0 %v1910, 64
  %v1954 = vpop.permute.xlu0 %1953
  %1955 = vrot.lane.b32.xlu0 %v1911, 64
  %v1956 = vpop.permute.xlu0 %1955
  %1957 = vrot.lane.b32.xlu0 %v1912, 64
  %v1958 = vpop.permute.xlu0 %1957
  %1959 = vrot.lane.b32.xlu0 %v1913, 64
  %v1960 = vpop.permute.xlu0 %1959
  %1961 = vrot.lane.b32.xlu0 %v1914, 64
  %v1962 = vpop.permute.xlu0 %1961
  %vm1979 = vcmask 261120
  %v1980 = vsel %vm1979, %v1932, %v1803
  %v1981 = vsel %vm1979, %v1934, %v1804
  %v1982 = vsel %vm1979, %v1936, %v1805
  %v1983 = vsel %vm1979, %v1938, %v1806
  %v1984 = vsel %vm1979, %v1940, %v1807
  %v1985 = vsel %vm1979, %v1942, %v1808
  %v1986 = vsel %vm1979, %v1944, %v1809
  %v1987 = vsel %vm1979, %v1946, %v1810
  %v1988 = vsel %vm1979, %v1948, %v1811
  %v1989 = vsel %vm1979, %v1950, %v1812
  %v1990 = vsel %vm1979, %v1952, %v1813
  %v1991 = vsel %vm1979, %v1954, %v1814
  %v1992 = vsel %vm1979, %v1956, %v1815
  %v1993 = vsel %vm1979, %v1958, %v1816
  %v1994 = vsel %vm1979, %v1960, %v1817
  %v1995 = vsel %vm1979, %v1962, %v1818
  %vm1996 = vcmask 523264
  %1997 = vst.msk [vmem:[%s4] sm:$0xff] %vm1996, %v1980
  %1998 = vst.msk [vmem:[%s4 + $0x8] sm:$0xff] %vm1996, %v1981
  %1999 = vst.msk [vmem:[%s4 + $0x10] sm:$0xff] %vm1996, %v1982
  %2000 = vst.msk [vmem:[%s4 + $0x18] sm:$0xff] %vm1996, %v1983
  %2001 = vst.msk [vmem:[%s4 + $0x20] sm:$0xff] %vm1996, %v1984
  %2002 = vst.msk [vmem:[%s4 + $0x28] sm:$0xff] %vm1996, %v1985
  %2003 = vst.msk [vmem:[%s4 + $0x30] sm:$0xff] %vm1996, %v1986
  %2004 = vst.msk [vmem:[%s4 + $0x38] sm:$0xff] %vm1996, %v1987
  %2005 = vst.msk [vmem:[%s4 + $0x40] sm:$0xff] %vm1996, %v1988
  %2006 = vst.msk [vmem:[%s4 + $0x48] sm:$0xff] %vm1996, %v1989
  %2007 = vst.msk [vmem:[%s4 + $0x50] sm:$0xff] %vm1996, %v1990
  %2008 = vst.msk [vmem:[%s4 + $0x58] sm:$0xff] %vm1996, %v1991
  %2009 = vst.msk [vmem:[%s4 + $0x60] sm:$0xff] %vm1996, %v1992
  %2010 = vst.msk [vmem:[%s4 + $0x68] sm:$0xff] %vm1996, %v1993
  %2011 = vst.msk [vmem:[%s4 + $0x70] sm:$0xff] %vm1996, %v1994
  %2012 = vst.msk [vmem:[%s4 + $0x78] sm:$0xff] %vm1996, %v1995
  %v2013 = vxor.u32 %v1245, 2147483648
  %v2014 = vxor.u32 %v1248, 2147483648
  %v2015 = vxor.u32 %v1253, 2147483648
  %v2016 = vxor.u32 %v1256, 2147483648
  %v2017 = vxor.u32 %v1261, 2147483648
  %v2018 = vxor.u32 %v1264, 2147483648
  %v2019 = vxor.u32 %v1269, 2147483648
  %v2020 = vxor.u32 %v1272, 2147483648
  %v2021 = vxor.u32 %v1277, 2147483648
  %v2022 = vxor.u32 %v1280, 2147483648
  %v2023 = vxor.u32 %v1285, 2147483648
  %v2024 = vxor.u32 %v1288, 2147483648
  %v2025 = vxor.u32 %v1293, 2147483648
  %v2026 = vxor.u32 %v1296, 2147483648
  %v2027 = vxor.u32 %v1301, 2147483648
  %v2028 = vxor.u32 %v1304, 2147483648
  %v2029 = vmul.f32 %v2013, 1.442695
  %v2030 = vpow.pop %v2029
  %v2031 = vmul.f32 %v2014, 1.442695
  %v2032 = vpow.pop %v2031
  %v2033 = vmul.f32 %v2015, 1.442695
  %v2034 = vpow.pop %v2033
  %v2035 = vmul.f32 %v2016, 1.442695
  %v2036 = vpow.pop %v2035
  %v2037 = vmul.f32 %v2017, 1.442695
  %v2038 = vpow.pop %v2037
  %v2039 = vmul.f32 %v2018, 1.442695
  %v2040 = vpow.pop %v2039
  %v2041 = vmul.f32 %v2019, 1.442695
  %v2042 = vpow.pop %v2041
  %v2043 = vmul.f32 %v2020, 1.442695
  %v2044 = vpow.pop %v2043
  %v2045 = vmul.f32 %v2021, 1.442695
  %v2046 = vpow.pop %v2045
  %v2047 = vmul.f32 %v2022, 1.442695
  %v2048 = vpow.pop %v2047
  %v2049 = vmul.f32 %v2023, 1.442695
  %v2050 = vpow.pop %v2049
  %v2051 = vmul.f32 %v2024, 1.442695
  %v2052 = vpow.pop %v2051
  %v2053 = vmul.f32 %v2025, 1.442695
  %v2054 = vpow.pop %v2053
  %v2055 = vmul.f32 %v2026, 1.442695
  %v2056 = vpow.pop %v2055
  %v2057 = vmul.f32 %v2027, 1.442695
  %v2058 = vpow.pop %v2057
  %v2059 = vmul.f32 %v2028, 1.442695
  %v2060 = vpow.pop %v2059
  %v2061 = vadd.f32 %v2030, 1.0
  %v2062 = vadd.f32 %v2032, 1.0
  %v2063 = vadd.f32 %v2034, 1.0
  %v2064 = vadd.f32 %v2036, 1.0
  %v2065 = vadd.f32 %v2038, 1.0
  %v2066 = vadd.f32 %v2040, 1.0
  %v2067 = vadd.f32 %v2042, 1.0
  %v2068 = vadd.f32 %v2044, 1.0
  %v2069 = vadd.f32 %v2046, 1.0
  %v2070 = vadd.f32 %v2048, 1.0
  %v2071 = vadd.f32 %v2050, 1.0
  %v2072 = vadd.f32 %v2052, 1.0
  %v2073 = vadd.f32 %v2054, 1.0
  %v2074 = vadd.f32 %v2056, 1.0
  %v2075 = vadd.f32 %v2058, 1.0
  %v2076 = vadd.f32 %v2060, 1.0
  %v2077 = vrcp.pop %v2061
  %v2078 = vmul.f32 1.0, %v2077
  %v2079 = vrcp.pop %v2062
  %v2080 = vmul.f32 1.0, %v2079
  %v2081 = vrcp.pop %v2063
  %v2082 = vmul.f32 1.0, %v2081
  %v2083 = vrcp.pop %v2064
  %v2084 = vmul.f32 1.0, %v2083
  %v2085 = vrcp.pop %v2065
  %v2086 = vmul.f32 1.0, %v2085
  %v2087 = vrcp.pop %v2066
  %v2088 = vmul.f32 1.0, %v2087
  %v2089 = vrcp.pop %v2067
  %v2090 = vmul.f32 1.0, %v2089
  %v2091 = vrcp.pop %v2068
  %v2092 = vmul.f32 1.0, %v2091
  %v2093 = vrcp.pop %v2069
  %v2094 = vmul.f32 1.0, %v2093
  %v2095 = vrcp.pop %v2070
  %v2096 = vmul.f32 1.0, %v2095
  %v2097 = vrcp.pop %v2071
  %v2098 = vmul.f32 1.0, %v2097
  %v2099 = vrcp.pop %v2072
  %v2100 = vmul.f32 1.0, %v2099
  %v2101 = vrcp.pop %v2073
  %v2102 = vmul.f32 1.0, %v2101
  %v2103 = vrcp.pop %v2074
  %v2104 = vmul.f32 1.0, %v2103
  %v2105 = vrcp.pop %v2075
  %v2106 = vmul.f32 1.0, %v2105
  %v2107 = vrcp.pop %v2076
  %v2108 = vmul.f32 1.0, %v2107
  %v2109 = vld [vmem:[%s3 + $0x80] sm:$0xff]
  %v2110 = vld [vmem:[%s3 + $0x88] sm:$0xff]
  %v2111 = vld [vmem:[%s3 + $0x90] sm:$0xff]
  %v2112 = vld [vmem:[%s3 + $0x98] sm:$0xff]
  %v2113 = vld [vmem:[%s3 + $0xa0] sm:$0xff]
  %v2114 = vld [vmem:[%s3 + $0xa8] sm:$0xff]
  %v2115 = vld [vmem:[%s3 + $0xb0] sm:$0xff]
  %v2116 = vld [vmem:[%s3 + $0xb8] sm:$0xff]
  %v2117 = vld [vmem:[%s3 + $0xc0] sm:$0xff]
  %v2118 = vld [vmem:[%s3 + $0xc8] sm:$0xff]
  %v2119 = vld [vmem:[%s3 + $0xd0] sm:$0xff]
  %v2120 = vld [vmem:[%s3 + $0xd8] sm:$0xff]
  %v2121 = vld [vmem:[%s3 + $0xe0] sm:$0xff]
  %v2122 = vld [vmem:[%s3 + $0xe8] sm:$0xff]
  %v2123 = vld [vmem:[%s3 + $0xf0] sm:$0xff]
  %v2124 = vld [vmem:[%s3 + $0xf8] sm:$0xff]
  %2141 = vrot.lane.b32.xlu0 %v2109, 32
  %v2142 = vpop.permute.xlu0 %2141
  %2143 = vrot.lane.b32.xlu0 %v2110, 32
  %v2144 = vpop.permute.xlu0 %2143
  %2145 = vrot.lane.b32.xlu0 %v2111, 32
  %v2146 = vpop.permute.xlu0 %2145
  %2147 = vrot.lane.b32.xlu0 %v2112, 32
  %v2148 = vpop.permute.xlu0 %2147
  %2149 = vrot.lane.b32.xlu0 %v2113, 32
  %v2150 = vpop.permute.xlu0 %2149
  %2151 = vrot.lane.b32.xlu0 %v2114, 32
  %v2152 = vpop.permute.xlu0 %2151
  %2153 = vrot.lane.b32.xlu0 %v2115, 32
  %v2154 = vpop.permute.xlu0 %2153
  %2155 = vrot.lane.b32.xlu0 %v2116, 32
  %v2156 = vpop.permute.xlu0 %2155
  %2157 = vrot.lane.b32.xlu0 %v2117, 32
  %v2158 = vpop.permute.xlu0 %2157
  %2159 = vrot.lane.b32.xlu0 %v2118, 32
  %v2160 = vpop.permute.xlu0 %2159
  %2161 = vrot.lane.b32.xlu0 %v2119, 32
  %v2162 = vpop.permute.xlu0 %2161
  %2163 = vrot.lane.b32.xlu0 %v2120, 32
  %v2164 = vpop.permute.xlu0 %2163
  %2165 = vrot.lane.b32.xlu0 %v2121, 32
  %v2166 = vpop.permute.xlu0 %2165
  %2167 = vrot.lane.b32.xlu0 %v2122, 32
  %v2168 = vpop.permute.xlu0 %2167
  %2169 = vrot.lane.b32.xlu0 %v2123, 32
  %v2170 = vpop.permute.xlu0 %2169
  %2171 = vrot.lane.b32.xlu0 %v2124, 32
  %v2172 = vpop.permute.xlu0 %2171
  %v2189 = vmul.f32 %v2078, %v2142
  %v2190 = vmul.f32 %v2080, %v2144
  %v2191 = vmul.f32 %v2082, %v2146
  %v2192 = vmul.f32 %v2084, %v2148
  %v2193 = vmul.f32 %v2086, %v2150
  %v2194 = vmul.f32 %v2088, %v2152
  %v2195 = vmul.f32 %v2090, %v2154
  %v2196 = vmul.f32 %v2092, %v2156
  %v2197 = vmul.f32 %v2094, %v2158
  %v2198 = vmul.f32 %v2096, %v2160
  %v2199 = vmul.f32 %v2098, %v2162
  %v2200 = vmul.f32 %v2100, %v2164
  %v2201 = vmul.f32 %v2102, %v2166
  %v2202 = vmul.f32 %v2104, %v2168
  %v2203 = vmul.f32 %v2106, %v2170
  %v2204 = vmul.f32 %v2108, %v2172
  %2221 = vrot.lane.b32.xlu0 %v2078, 32
  %v2222 = vpop.permute.xlu0 %2221
  %2223 = vrot.lane.b32.xlu0 %v2080, 32
  %v2224 = vpop.permute.xlu0 %2223
  %2225 = vrot.lane.b32.xlu0 %v2082, 32
  %v2226 = vpop.permute.xlu0 %2225
  %2227 = vrot.lane.b32.xlu0 %v2084, 32
  %v2228 = vpop.permute.xlu0 %2227
  %2229 = vrot.lane.b32.xlu0 %v2086, 32
  %v2230 = vpop.permute.xlu0 %2229
  %2231 = vrot.lane.b32.xlu0 %v2088, 32
  %v2232 = vpop.permute.xlu0 %2231
  %2233 = vrot.lane.b32.xlu0 %v2090, 32
  %v2234 = vpop.permute.xlu0 %2233
  %2235 = vrot.lane.b32.xlu0 %v2092, 32
  %v2236 = vpop.permute.xlu0 %2235
  %2237 = vrot.lane.b32.xlu0 %v2094, 32
  %v2238 = vpop.permute.xlu0 %2237
  %2239 = vrot.lane.b32.xlu0 %v2096, 32
  %v2240 = vpop.permute.xlu0 %2239
  %2241 = vrot.lane.b32.xlu0 %v2098, 32
  %v2242 = vpop.permute.xlu0 %2241
  %2243 = vrot.lane.b32.xlu0 %v2100, 32
  %v2244 = vpop.permute.xlu0 %2243
  %2245 = vrot.lane.b32.xlu0 %v2102, 32
  %v2246 = vpop.permute.xlu0 %2245
  %2247 = vrot.lane.b32.xlu0 %v2104, 32
  %v2248 = vpop.permute.xlu0 %2247
  %2249 = vrot.lane.b32.xlu0 %v2106, 32
  %v2250 = vpop.permute.xlu0 %2249
  %2251 = vrot.lane.b32.xlu0 %v2108, 32
  %v2252 = vpop.permute.xlu0 %2251
  %v2269 = vmul.f32 %v2078, %v2222
  %v2270 = vmul.f32 %v2080, %v2224
  %v2271 = vmul.f32 %v2082, %v2226
  %v2272 = vmul.f32 %v2084, %v2228
  %v2273 = vmul.f32 %v2086, %v2230
  %v2274 = vmul.f32 %v2088, %v2232
  %v2275 = vmul.f32 %v2090, %v2234
  %v2276 = vmul.f32 %v2092, %v2236
  %v2277 = vmul.f32 %v2094, %v2238
  %v2278 = vmul.f32 %v2096, %v2240
  %v2279 = vmul.f32 %v2098, %v2242
  %v2280 = vmul.f32 %v2100, %v2244
  %v2281 = vmul.f32 %v2102, %v2246
  %v2282 = vmul.f32 %v2104, %v2248
  %v2283 = vmul.f32 %v2106, %v2250
  %v2284 = vmul.f32 %v2108, %v2252
  %v2285 = vmul.f32 %v2269, 2.0
  %v2286 = vmul.f32 %v2270, 2.0
  %v2287 = vmul.f32 %v2271, 2.0
  %v2288 = vmul.f32 %v2272, 2.0
  %v2289 = vmul.f32 %v2273, 2.0
  %v2290 = vmul.f32 %v2274, 2.0
  %v2291 = vmul.f32 %v2275, 2.0
  %v2292 = vmul.f32 %v2276, 2.0
  %v2293 = vmul.f32 %v2277, 2.0
  %v2294 = vmul.f32 %v2278, 2.0
  %v2295 = vmul.f32 %v2279, 2.0
  %v2296 = vmul.f32 %v2280, 2.0
  %v2297 = vmul.f32 %v2281, 2.0
  %v2298 = vmul.f32 %v2282, 2.0
  %v2299 = vmul.f32 %v2283, 2.0
  %v2300 = vmul.f32 %v2284, 2.0
  %2317 = vrot.lane.b32.xlu0 %v2285, 32
  %v2318 = vpop.permute.xlu0 %2317
  %2319 = vrot.lane.b32.xlu0 %v2286, 32
  %v2320 = vpop.permute.xlu0 %2319
  %2321 = vrot.lane.b32.xlu0 %v2287, 32
  %v2322 = vpop.permute.xlu0 %2321
  %2323 = vrot.lane.b32.xlu0 %v2288, 32
  %v2324 = vpop.permute.xlu0 %2323
  %2325 = vrot.lane.b32.xlu0 %v2289, 32
  %v2326 = vpop.permute.xlu0 %2325
  %2327 = vrot.lane.b32.xlu0 %v2290, 32
  %v2328 = vpop.permute.xlu0 %2327
  %2329 = vrot.lane.b32.xlu0 %v2291, 32
  %v2330 = vpop.permute.xlu0 %2329
  %2331 = vrot.lane.b32.xlu0 %v2292, 32
  %v2332 = vpop.permute.xlu0 %2331
  %2333 = vrot.lane.b32.xlu0 %v2293, 32
  %v2334 = vpop.permute.xlu0 %2333
  %2335 = vrot.lane.b32.xlu0 %v2294, 32
  %v2336 = vpop.permute.xlu0 %2335
  %2337 = vrot.lane.b32.xlu0 %v2295, 32
  %v2338 = vpop.permute.xlu0 %2337
  %2339 = vrot.lane.b32.xlu0 %v2296, 32
  %v2340 = vpop.permute.xlu0 %2339
  %2341 = vrot.lane.b32.xlu0 %v2297, 32
  %v2342 = vpop.permute.xlu0 %2341
  %2343 = vrot.lane.b32.xlu0 %v2298, 32
  %v2344 = vpop.permute.xlu0 %2343
  %2345 = vrot.lane.b32.xlu0 %v2299, 32
  %v2346 = vpop.permute.xlu0 %2345
  %2347 = vrot.lane.b32.xlu0 %v2300, 32
  %v2348 = vpop.permute.xlu0 %2347
  %v2365 = vadd.f32 %v2189, %v2318
  %v2366 = vadd.f32 %v2190, %v2320
  %v2367 = vadd.f32 %v2191, %v2322
  %v2368 = vadd.f32 %v2192, %v2324
  %v2369 = vadd.f32 %v2193, %v2326
  %v2370 = vadd.f32 %v2194, %v2328
  %v2371 = vadd.f32 %v2195, %v2330
  %v2372 = vadd.f32 %v2196, %v2332
  %v2373 = vadd.f32 %v2197, %v2334
  %v2374 = vadd.f32 %v2198, %v2336
  %v2375 = vadd.f32 %v2199, %v2338
  %v2376 = vadd.f32 %v2200, %v2340
  %v2377 = vadd.f32 %v2201, %v2342
  %v2378 = vadd.f32 %v2202, %v2344
  %v2379 = vadd.f32 %v2203, %v2346
  %v2380 = vadd.f32 %v2204, %v2348
  %v2381 = vsub.f32 %v2365, %v2222
  %v2382 = vsub.f32 %v2366, %v2224
  %v2383 = vsub.f32 %v2367, %v2226
  %v2384 = vsub.f32 %v2368, %v2228
  %v2385 = vsub.f32 %v2369, %v2230
  %v2386 = vsub.f32 %v2370, %v2232
  %v2387 = vsub.f32 %v2371, %v2234
  %v2388 = vsub.f32 %v2372, %v2236
  %v2389 = vsub.f32 %v2373, %v2238
  %v2390 = vsub.f32 %v2374, %v2240
  %v2391 = vsub.f32 %v2375, %v2242
  %v2392 = vsub.f32 %v2376, %v2244
  %v2393 = vsub.f32 %v2377, %v2246
  %v2394 = vsub.f32 %v2378, %v2248
  %v2395 = vsub.f32 %v2379, %v2250
  %v2396 = vsub.f32 %v2380, %v2252
  %v2397 = vtanh.pop %v2381
  %v2398 = vtanh.pop %v2382
  %v2399 = vtanh.pop %v2383
  %v2400 = vtanh.pop %v2384
  %v2401 = vtanh.pop %v2385
  %v2402 = vtanh.pop %v2386
  %v2403 = vtanh.pop %v2387
  %v2404 = vtanh.pop %v2388
  %v2405 = vtanh.pop %v2389
  %v2406 = vtanh.pop %v2390
  %v2407 = vtanh.pop %v2391
  %v2408 = vtanh.pop %v2392
  %v2409 = vtanh.pop %v2393
  %v2410 = vtanh.pop %v2394
  %v2411 = vtanh.pop %v2395
  %v2412 = vtanh.pop %v2396
  %2429 = vrot.lane.b32.xlu0 %v2397, 32
  %v2430 = vpop.permute.xlu0 %2429
  %2431 = vrot.lane.b32.xlu0 %v2398, 32
  %v2432 = vpop.permute.xlu0 %2431
  %2433 = vrot.lane.b32.xlu0 %v2399, 32
  %v2434 = vpop.permute.xlu0 %2433
  %2435 = vrot.lane.b32.xlu0 %v2400, 32
  %v2436 = vpop.permute.xlu0 %2435
  %2437 = vrot.lane.b32.xlu0 %v2401, 32
  %v2438 = vpop.permute.xlu0 %2437
  %2439 = vrot.lane.b32.xlu0 %v2402, 32
  %v2440 = vpop.permute.xlu0 %2439
  %2441 = vrot.lane.b32.xlu0 %v2403, 32
  %v2442 = vpop.permute.xlu0 %2441
  %2443 = vrot.lane.b32.xlu0 %v2404, 32
  %v2444 = vpop.permute.xlu0 %2443
  %2445 = vrot.lane.b32.xlu0 %v2405, 32
  %v2446 = vpop.permute.xlu0 %2445
  %2447 = vrot.lane.b32.xlu0 %v2406, 32
  %v2448 = vpop.permute.xlu0 %2447
  %2449 = vrot.lane.b32.xlu0 %v2407, 32
  %v2450 = vpop.permute.xlu0 %2449
  %2451 = vrot.lane.b32.xlu0 %v2408, 32
  %v2452 = vpop.permute.xlu0 %2451
  %2453 = vrot.lane.b32.xlu0 %v2409, 32
  %v2454 = vpop.permute.xlu0 %2453
  %2455 = vrot.lane.b32.xlu0 %v2410, 32
  %v2456 = vpop.permute.xlu0 %2455
  %2457 = vrot.lane.b32.xlu0 %v2411, 32
  %v2458 = vpop.permute.xlu0 %2457
  %2459 = vrot.lane.b32.xlu0 %v2412, 32
  %v2460 = vpop.permute.xlu0 %2459
  %v2477 = vmul.f32 %v2078, %v2430
  %v2478 = vmul.f32 %v2080, %v2432
  %v2479 = vmul.f32 %v2082, %v2434
  %v2480 = vmul.f32 %v2084, %v2436
  %v2481 = vmul.f32 %v2086, %v2438
  %v2482 = vmul.f32 %v2088, %v2440
  %v2483 = vmul.f32 %v2090, %v2442
  %v2484 = vmul.f32 %v2092, %v2444
  %v2485 = vmul.f32 %v2094, %v2446
  %v2486 = vmul.f32 %v2096, %v2448
  %v2487 = vmul.f32 %v2098, %v2450
  %v2488 = vmul.f32 %v2100, %v2452
  %v2489 = vmul.f32 %v2102, %v2454
  %v2490 = vmul.f32 %v2104, %v2456
  %v2491 = vmul.f32 %v2106, %v2458
  %v2492 = vmul.f32 %v2108, %v2460
  %2509 = vrot.lane.b32.xlu0 %v2477, 64
  %v2510 = vpop.permute.xlu0 %2509
  %2511 = vrot.lane.b32.xlu0 %v2478, 64
  %v2512 = vpop.permute.xlu0 %2511
  %2513 = vrot.lane.b32.xlu0 %v2479, 64
  %v2514 = vpop.permute.xlu0 %2513
  %2515 = vrot.lane.b32.xlu0 %v2480, 64
  %v2516 = vpop.permute.xlu0 %2515
  %2517 = vrot.lane.b32.xlu0 %v2481, 64
  %v2518 = vpop.permute.xlu0 %2517
  %2519 = vrot.lane.b32.xlu0 %v2482, 64
  %v2520 = vpop.permute.xlu0 %2519
  %2521 = vrot.lane.b32.xlu0 %v2483, 64
  %v2522 = vpop.permute.xlu0 %2521
  %2523 = vrot.lane.b32.xlu0 %v2484, 64
  %v2524 = vpop.permute.xlu0 %2523
  %2525 = vrot.lane.b32.xlu0 %v2485, 64
  %v2526 = vpop.permute.xlu0 %2525
  %2527 = vrot.lane.b32.xlu0 %v2486, 64
  %v2528 = vpop.permute.xlu0 %2527
  %2529 = vrot.lane.b32.xlu0 %v2487, 64
  %v2530 = vpop.permute.xlu0 %2529
  %2531 = vrot.lane.b32.xlu0 %v2488, 64
  %v2532 = vpop.permute.xlu0 %2531
  %2533 = vrot.lane.b32.xlu0 %v2489, 64
  %v2534 = vpop.permute.xlu0 %2533
  %2535 = vrot.lane.b32.xlu0 %v2490, 64
  %v2536 = vpop.permute.xlu0 %2535
  %2537 = vrot.lane.b32.xlu0 %v2491, 64
  %v2538 = vpop.permute.xlu0 %2537
  %2539 = vrot.lane.b32.xlu0 %v2492, 64
  %v2540 = vpop.permute.xlu0 %2539
  %v2557 = vsel %vm1979, %v2510, %v2381
  %v2558 = vsel %vm1979, %v2512, %v2382
  %v2559 = vsel %vm1979, %v2514, %v2383
  %v2560 = vsel %vm1979, %v2516, %v2384
  %v2561 = vsel %vm1979, %v2518, %v2385
  %v2562 = vsel %vm1979, %v2520, %v2386
  %v2563 = vsel %vm1979, %v2522, %v2387
  %v2564 = vsel %vm1979, %v2524, %v2388
  %v2565 = vsel %vm1979, %v2526, %v2389
  %v2566 = vsel %vm1979, %v2528, %v2390
  %v2567 = vsel %vm1979, %v2530, %v2391
  %v2568 = vsel %vm1979, %v2532, %v2392
  %v2569 = vsel %vm1979, %v2534, %v2393
  %v2570 = vsel %vm1979, %v2536, %v2394
  %v2571 = vsel %vm1979, %v2538, %v2395
  %v2572 = vsel %vm1979, %v2540, %v2396
  %2573 = vst.msk [vmem:[%s4 + $0x80] sm:$0xff] %vm1996, %v2557
  %2574 = vst.msk [vmem:[%s4 + $0x88] sm:$0xff] %vm1996, %v2558
  %2575 = vst.msk [vmem:[%s4 + $0x90] sm:$0xff] %vm1996, %v2559
  %2576 = vst.msk [vmem:[%s4 + $0x98] sm:$0xff] %vm1996, %v2560
  %2577 = vst.msk [vmem:[%s4 + $0xa0] sm:$0xff] %vm1996, %v2561
  %2578 = vst.msk [vmem:[%s4 + $0xa8] sm:$0xff] %vm1996, %v2562
  %2579 = vst.msk [vmem:[%s4 + $0xb0] sm:$0xff] %vm1996, %v2563
  %2580 = vst.msk [vmem:[%s4 + $0xb8] sm:$0xff] %vm1996, %v2564
  %2581 = vst.msk [vmem:[%s4 + $0xc0] sm:$0xff] %vm1996, %v2565
  %2582 = vst.msk [vmem:[%s4 + $0xc8] sm:$0xff] %vm1996, %v2566
  %2583 = vst.msk [vmem:[%s4 + $0xd0] sm:$0xff] %vm1996, %v2567
  %2584 = vst.msk [vmem:[%s4 + $0xd8] sm:$0xff] %vm1996, %v2568
  %2585 = vst.msk [vmem:[%s4 + $0xe0] sm:$0xff] %vm1996, %v2569
  %2586 = vst.msk [vmem:[%s4 + $0xe8] sm:$0xff] %vm1996, %v2570
  %2587 = vst.msk [vmem:[%s4 + $0xf0] sm:$0xff] %vm1996, %v2571
  %2588 = vst.msk [vmem:[%s4 + $0xf8] sm:$0xff] %vm1996, %v2572
  %v2589 = vxor.u32 %v1309, 2147483648
  %v2590 = vxor.u32 %v1312, 2147483648
  %v2591 = vxor.u32 %v1317, 2147483648
  %v2592 = vxor.u32 %v1320, 2147483648
  %v2593 = vxor.u32 %v1325, 2147483648
  %v2594 = vxor.u32 %v1328, 2147483648
  %v2595 = vxor.u32 %v1333, 2147483648
  %v2596 = vxor.u32 %v1336, 2147483648
  %v2597 = vxor.u32 %v1341, 2147483648
  %v2598 = vxor.u32 %v1344, 2147483648
  %v2599 = vxor.u32 %v1349, 2147483648
  %v2600 = vxor.u32 %v1352, 2147483648
  %v2601 = vxor.u32 %v1357, 2147483648
  %v2602 = vxor.u32 %v1360, 2147483648
  %v2603 = vxor.u32 %v1365, 2147483648
  %v2604 = vxor.u32 %v1368, 2147483648
  %v2605 = vmul.f32 %v2589, 1.442695
  %v2606 = vpow.pop %v2605
  %v2607 = vmul.f32 %v2590, 1.442695
  %v2608 = vpow.pop %v2607
  %v2609 = vmul.f32 %v2591, 1.442695
  %v2610 = vpow.pop %v2609
  %v2611 = vmul.f32 %v2592, 1.442695
  %v2612 = vpow.pop %v2611
  %v2613 = vmul.f32 %v2593, 1.442695
  %v2614 = vpow.pop %v2613
  %v2615 = vmul.f32 %v2594, 1.442695
  %v2616 = vpow.pop %v2615
  %v2617 = vmul.f32 %v2595, 1.442695
  %v2618 = vpow.pop %v2617
  %v2619 = vmul.f32 %v2596, 1.442695
  %v2620 = vpow.pop %v2619
  %v2621 = vmul.f32 %v2597, 1.442695
  %v2622 = vpow.pop %v2621
  %v2623 = vmul.f32 %v2598, 1.442695
  %v2624 = vpow.pop %v2623
  %v2625 = vmul.f32 %v2599, 1.442695
  %v2626 = vpow.pop %v2625
  %v2627 = vmul.f32 %v2600, 1.442695
  %v2628 = vpow.pop %v2627
  %v2629 = vmul.f32 %v2601, 1.442695
  %v2630 = vpow.pop %v2629
  %v2631 = vmul.f32 %v2602, 1.442695
  %v2632 = vpow.pop %v2631
  %v2633 = vmul.f32 %v2603, 1.442695
  %v2634 = vpow.pop %v2633
  %v2635 = vmul.f32 %v2604, 1.442695
  %v2636 = vpow.pop %v2635
  %v2637 = vadd.f32 %v2606, 1.0
  %v2638 = vadd.f32 %v2608, 1.0
  %v2639 = vadd.f32 %v2610, 1.0
  %v2640 = vadd.f32 %v2612, 1.0
  %v2641 = vadd.f32 %v2614, 1.0
  %v2642 = vadd.f32 %v2616, 1.0
  %v2643 = vadd.f32 %v2618, 1.0
  %v2644 = vadd.f32 %v2620, 1.0
  %v2645 = vadd.f32 %v2622, 1.0
  %v2646 = vadd.f32 %v2624, 1.0
  %v2647 = vadd.f32 %v2626, 1.0
  %v2648 = vadd.f32 %v2628, 1.0
  %v2649 = vadd.f32 %v2630, 1.0
  %v2650 = vadd.f32 %v2632, 1.0
  %v2651 = vadd.f32 %v2634, 1.0
  %v2652 = vadd.f32 %v2636, 1.0
  %v2653 = vrcp.pop %v2637
  %v2654 = vmul.f32 1.0, %v2653
  %v2655 = vrcp.pop %v2638
  %v2656 = vmul.f32 1.0, %v2655
  %v2657 = vrcp.pop %v2639
  %v2658 = vmul.f32 1.0, %v2657
  %v2659 = vrcp.pop %v2640
  %v2660 = vmul.f32 1.0, %v2659
  %v2661 = vrcp.pop %v2641
  %v2662 = vmul.f32 1.0, %v2661
  %v2663 = vrcp.pop %v2642
  %v2664 = vmul.f32 1.0, %v2663
  %v2665 = vrcp.pop %v2643
  %v2666 = vmul.f32 1.0, %v2665
  %v2667 = vrcp.pop %v2644
  %v2668 = vmul.f32 1.0, %v2667
  %v2669 = vrcp.pop %v2645
  %v2670 = vmul.f32 1.0, %v2669
  %v2671 = vrcp.pop %v2646
  %v2672 = vmul.f32 1.0, %v2671
  %v2673 = vrcp.pop %v2647
  %v2674 = vmul.f32 1.0, %v2673
  %v2675 = vrcp.pop %v2648
  %v2676 = vmul.f32 1.0, %v2675
  %v2677 = vrcp.pop %v2649
  %v2678 = vmul.f32 1.0, %v2677
  %v2679 = vrcp.pop %v2650
  %v2680 = vmul.f32 1.0, %v2679
  %v2681 = vrcp.pop %v2651
  %v2682 = vmul.f32 1.0, %v2681
  %v2683 = vrcp.pop %v2652
  %v2684 = vmul.f32 1.0, %v2683
  %v2685 = vld [vmem:[%s3 + $0x100] sm:$0xff]
  %v2686 = vld [vmem:[%s3 + $0x108] sm:$0xff]
  %v2687 = vld [vmem:[%s3 + $0x110] sm:$0xff]
  %v2688 = vld [vmem:[%s3 + $0x118] sm:$0xff]
  %v2689 = vld [vmem:[%s3 + $0x120] sm:$0xff]
  %v2690 = vld [vmem:[%s3 + $0x128] sm:$0xff]
  %v2691 = vld [vmem:[%s3 + $0x130] sm:$0xff]
  %v2692 = vld [vmem:[%s3 + $0x138] sm:$0xff]
  %v2693 = vld [vmem:[%s3 + $0x140] sm:$0xff]
  %v2694 = vld [vmem:[%s3 + $0x148] sm:$0xff]
  %v2695 = vld [vmem:[%s3 + $0x150] sm:$0xff]
  %v2696 = vld [vmem:[%s3 + $0x158] sm:$0xff]
  %v2697 = vld [vmem:[%s3 + $0x160] sm:$0xff]
  %v2698 = vld [vmem:[%s3 + $0x168] sm:$0xff]
  %v2699 = vld [vmem:[%s3 + $0x170] sm:$0xff]
  %v2700 = vld [vmem:[%s3 + $0x178] sm:$0xff]
  %2717 = vrot.lane.b32.xlu0 %v2685, 32
  %v2718 = vpop.permute.xlu0 %2717
  %2719 = vrot.lane.b32.xlu0 %v2686, 32
  %v2720 = vpop.permute.xlu0 %2719
  %2721 = vrot.lane.b32.xlu0 %v2687, 32
  %v2722 = vpop.permute.xlu0 %2721
  %2723 = vrot.lane.b32.xlu0 %v2688, 32
  %v2724 = vpop.permute.xlu0 %2723
  %2725 = vrot.lane.b32.xlu0 %v2689, 32
  %v2726 = vpop.permute.xlu0 %2725
  %2727 = vrot.lane.b32.xlu0 %v2690, 32
  %v2728 = vpop.permute.xlu0 %2727
  %2729 = vrot.lane.b32.xlu0 %v2691, 32
  %v2730 = vpop.permute.xlu0 %2729
  %2731 = vrot.lane.b32.xlu0 %v2692, 32
  %v2732 = vpop.permute.xlu0 %2731
  %2733 = vrot.lane.b32.xlu0 %v2693, 32
  %v2734 = vpop.permute.xlu0 %2733
  %2735 = vrot.lane.b32.xlu0 %v2694, 32
  %v2736 = vpop.permute.xlu0 %2735
  %2737 = vrot.lane.b32.xlu0 %v2695, 32
  %v2738 = vpop.permute.xlu0 %2737
  %2739 = vrot.lane.b32.xlu0 %v2696, 32
  %v2740 = vpop.permute.xlu0 %2739
  %2741 = vrot.lane.b32.xlu0 %v2697, 32
  %v2742 = vpop.permute.xlu0 %2741
  %2743 = vrot.lane.b32.xlu0 %v2698, 32
  %v2744 = vpop.permute.xlu0 %2743
  %2745 = vrot.lane.b32.xlu0 %v2699, 32
  %v2746 = vpop.permute.xlu0 %2745
  %2747 = vrot.lane.b32.xlu0 %v2700, 32
  %v2748 = vpop.permute.xlu0 %2747
  %v2765 = vmul.f32 %v2654, %v2718
  %v2766 = vmul.f32 %v2656, %v2720
  %v2767 = vmul.f32 %v2658, %v2722
  %v2768 = vmul.f32 %v2660, %v2724
  %v2769 = vmul.f32 %v2662, %v2726
  %v2770 = vmul.f32 %v2664, %v2728
  %v2771 = vmul.f32 %v2666, %v2730
  %v2772 = vmul.f32 %v2668, %v2732
  %v2773 = vmul.f32 %v2670, %v2734
  %v2774 = vmul.f32 %v2672, %v2736
  %v2775 = vmul.f32 %v2674, %v2738
  %v2776 = vmul.f32 %v2676, %v2740
  %v2777 = vmul.f32 %v2678, %v2742
  %v2778 = vmul.f32 %v2680, %v2744
  %v2779 = vmul.f32 %v2682, %v2746
  %v2780 = vmul.f32 %v2684, %v2748
  %2797 = vrot.lane.b32.xlu0 %v2654, 32
  %v2798 = vpop.permute.xlu0 %2797
  %2799 = vrot.lane.b32.xlu0 %v2656, 32
  %v2800 = vpop.permute.xlu0 %2799
  %2801 = vrot.lane.b32.xlu0 %v2658, 32
  %v2802 = vpop.permute.xlu0 %2801
  %2803 = vrot.lane.b32.xlu0 %v2660, 32
  %v2804 = vpop.permute.xlu0 %2803
  %2805 = vrot.lane.b32.xlu0 %v2662, 32
  %v2806 = vpop.permute.xlu0 %2805
  %2807 = vrot.lane.b32.xlu0 %v2664, 32
  %v2808 = vpop.permute.xlu0 %2807
  %2809 = vrot.lane.b32.xlu0 %v2666, 32
  %v2810 = vpop.permute.xlu0 %2809
  %2811 = vrot.lane.b32.xlu0 %v2668, 32
  %v2812 = vpop.permute.xlu0 %2811
  %2813 = vrot.lane.b32.xlu0 %v2670, 32
  %v2814 = vpop.permute.xlu0 %2813
  %2815 = vrot.lane.b32.xlu0 %v2672, 32
  %v2816 = vpop.permute.xlu0 %2815
  %2817 = vrot.lane.b32.xlu0 %v2674, 32
  %v2818 = vpop.permute.xlu0 %2817
  %2819 = vrot.lane.b32.xlu0 %v2676, 32
  %v2820 = vpop.permute.xlu0 %2819
  %2821 = vrot.lane.b32.xlu0 %v2678, 32
  %v2822 = vpop.permute.xlu0 %2821
  %2823 = vrot.lane.b32.xlu0 %v2680, 32
  %v2824 = vpop.permute.xlu0 %2823
  %2825 = vrot.lane.b32.xlu0 %v2682, 32
  %v2826 = vpop.permute.xlu0 %2825
  %2827 = vrot.lane.b32.xlu0 %v2684, 32
  %v2828 = vpop.permute.xlu0 %2827
  %v2845 = vmul.f32 %v2654, %v2798
  %v2846 = vmul.f32 %v2656, %v2800
  %v2847 = vmul.f32 %v2658, %v2802
  %v2848 = vmul.f32 %v2660, %v2804
  %v2849 = vmul.f32 %v2662, %v2806
  %v2850 = vmul.f32 %v2664, %v2808
  %v2851 = vmul.f32 %v2666, %v2810
  %v2852 = vmul.f32 %v2668, %v2812
  %v2853 = vmul.f32 %v2670, %v2814
  %v2854 = vmul.f32 %v2672, %v2816
  %v2855 = vmul.f32 %v2674, %v2818
  %v2856 = vmul.f32 %v2676, %v2820
  %v2857 = vmul.f32 %v2678, %v2822
  %v2858 = vmul.f32 %v2680, %v2824
  %v2859 = vmul.f32 %v2682, %v2826
  %v2860 = vmul.f32 %v2684, %v2828
  %v2861 = vmul.f32 %v2845, 2.0
  %v2862 = vmul.f32 %v2846, 2.0
  %v2863 = vmul.f32 %v2847, 2.0
  %v2864 = vmul.f32 %v2848, 2.0
  %v2865 = vmul.f32 %v2849, 2.0
  %v2866 = vmul.f32 %v2850, 2.0
  %v2867 = vmul.f32 %v2851, 2.0
  %v2868 = vmul.f32 %v2852, 2.0
  %v2869 = vmul.f32 %v2853, 2.0
  %v2870 = vmul.f32 %v2854, 2.0
  %v2871 = vmul.f32 %v2855, 2.0
  %v2872 = vmul.f32 %v2856, 2.0
  %v2873 = vmul.f32 %v2857, 2.0
  %v2874 = vmul.f32 %v2858, 2.0
  %v2875 = vmul.f32 %v2859, 2.0
  %v2876 = vmul.f32 %v2860, 2.0
  %2893 = vrot.lane.b32.xlu0 %v2861, 32
  %v2894 = vpop.permute.xlu0 %2893
  %2895 = vrot.lane.b32.xlu0 %v2862, 32
  %v2896 = vpop.permute.xlu0 %2895
  %2897 = vrot.lane.b32.xlu0 %v2863, 32
  %v2898 = vpop.permute.xlu0 %2897
  %2899 = vrot.lane.b32.xlu0 %v2864, 32
  %v2900 = vpop.permute.xlu0 %2899
  %2901 = vrot.lane.b32.xlu0 %v2865, 32
  %v2902 = vpop.permute.xlu0 %2901
  %2903 = vrot.lane.b32.xlu0 %v2866, 32
  %v2904 = vpop.permute.xlu0 %2903
  %2905 = vrot.lane.b32.xlu0 %v2867, 32
  %v2906 = vpop.permute.xlu0 %2905
  %2907 = vrot.lane.b32.xlu0 %v2868, 32
  %v2908 = vpop.permute.xlu0 %2907
  %2909 = vrot.lane.b32.xlu0 %v2869, 32
  %v2910 = vpop.permute.xlu0 %2909
  %2911 = vrot.lane.b32.xlu0 %v2870, 32
  %v2912 = vpop.permute.xlu0 %2911
  %2913 = vrot.lane.b32.xlu0 %v2871, 32
  %v2914 = vpop.permute.xlu0 %2913
  %2915 = vrot.lane.b32.xlu0 %v2872, 32
  %v2916 = vpop.permute.xlu0 %2915
  %2917 = vrot.lane.b32.xlu0 %v2873, 32
  %v2918 = vpop.permute.xlu0 %2917
  %2919 = vrot.lane.b32.xlu0 %v2874, 32
  %v2920 = vpop.permute.xlu0 %2919
  %2921 = vrot.lane.b32.xlu0 %v2875, 32
  %v2922 = vpop.permute.xlu0 %2921
  %2923 = vrot.lane.b32.xlu0 %v2876, 32
  %v2924 = vpop.permute.xlu0 %2923
  %v2941 = vadd.f32 %v2765, %v2894
  %v2942 = vadd.f32 %v2766, %v2896
  %v2943 = vadd.f32 %v2767, %v2898
  %v2944 = vadd.f32 %v2768, %v2900
  %v2945 = vadd.f32 %v2769, %v2902
  %v2946 = vadd.f32 %v2770, %v2904
  %v2947 = vadd.f32 %v2771, %v2906
  %v2948 = vadd.f32 %v2772, %v2908
  %v2949 = vadd.f32 %v2773, %v2910
  %v2950 = vadd.f32 %v2774, %v2912
  %v2951 = vadd.f32 %v2775, %v2914
  %v2952 = vadd.f32 %v2776, %v2916
  %v2953 = vadd.f32 %v2777, %v2918
  %v2954 = vadd.f32 %v2778, %v2920
  %v2955 = vadd.f32 %v2779, %v2922
  %v2956 = vadd.f32 %v2780, %v2924
  %v2957 = vsub.f32 %v2941, %v2798
  %v2958 = vsub.f32 %v2942, %v2800
  %v2959 = vsub.f32 %v2943, %v2802
  %v2960 = vsub.f32 %v2944, %v2804
  %v2961 = vsub.f32 %v2945, %v2806
  %v2962 = vsub.f32 %v2946, %v2808
  %v2963 = vsub.f32 %v2947, %v2810
  %v2964 = vsub.f32 %v2948, %v2812
  %v2965 = vsub.f32 %v2949, %v2814
  %v2966 = vsub.f32 %v2950, %v2816
  %v2967 = vsub.f32 %v2951, %v2818
  %v2968 = vsub.f32 %v2952, %v2820
  %v2969 = vsub.f32 %v2953, %v2822
  %v2970 = vsub.f32 %v2954, %v2824
  %v2971 = vsub.f32 %v2955, %v2826
  %v2972 = vsub.f32 %v2956, %v2828
  %v2973 = vtanh.pop %v2957
  %v2974 = vtanh.pop %v2958
  %v2975 = vtanh.pop %v2959
  %v2976 = vtanh.pop %v2960
  %v2977 = vtanh.pop %v2961
  %v2978 = vtanh.pop %v2962
  %v2979 = vtanh.pop %v2963
  %v2980 = vtanh.pop %v2964
  %v2981 = vtanh.pop %v2965
  %v2982 = vtanh.pop %v2966
  %v2983 = vtanh.pop %v2967
  %v2984 = vtanh.pop %v2968
  %v2985 = vtanh.pop %v2969
  %v2986 = vtanh.pop %v2970
  %v2987 = vtanh.pop %v2971
  %v2988 = vtanh.pop %v2972
  %3005 = vrot.lane.b32.xlu0 %v2973, 32
  %v3006 = vpop.permute.xlu0 %3005
  %3007 = vrot.lane.b32.xlu0 %v2974, 32
  %v3008 = vpop.permute.xlu0 %3007
  %3009 = vrot.lane.b32.xlu0 %v2975, 32
  %v3010 = vpop.permute.xlu0 %3009
  %3011 = vrot.lane.b32.xlu0 %v2976, 32
  %v3012 = vpop.permute.xlu0 %3011
  %3013 = vrot.lane.b32.xlu0 %v2977, 32
  %v3014 = vpop.permute.xlu0 %3013
  %3015 = vrot.lane.b32.xlu0 %v2978, 32
  %v3016 = vpop.permute.xlu0 %3015
  %3017 = vrot.lane.b32.xlu0 %v2979, 32
  %v3018 = vpop.permute.xlu0 %3017
  %3019 = vrot.lane.b32.xlu0 %v2980, 32
  %v3020 = vpop.permute.xlu0 %3019
  %3021 = vrot.lane.b32.xlu0 %v2981, 32
  %v3022 = vpop.permute.xlu0 %3021
  %3023 = vrot.lane.b32.xlu0 %v2982, 32
  %v3024 = vpop.permute.xlu0 %3023
  %3025 = vrot.lane.b32.xlu0 %v2983, 32
  %v3026 = vpop.permute.xlu0 %3025
  %3027 = vrot.lane.b32.xlu0 %v2984, 32
  %v3028 = vpop.permute.xlu0 %3027
  %3029 = vrot.lane.b32.xlu0 %v2985, 32
  %v3030 = vpop.permute.xlu0 %3029
  %3031 = vrot.lane.b32.xlu0 %v2986, 32
  %v3032 = vpop.permute.xlu0 %3031
  %3033 = vrot.lane.b32.xlu0 %v2987, 32
  %v3034 = vpop.permute.xlu0 %3033
  %3035 = vrot.lane.b32.xlu0 %v2988, 32
  %v3036 = vpop.permute.xlu0 %3035
  %v3053 = vmul.f32 %v2654, %v3006
  %v3054 = vmul.f32 %v2656, %v3008
  %v3055 = vmul.f32 %v2658, %v3010
  %v3056 = vmul.f32 %v2660, %v3012
  %v3057 = vmul.f32 %v2662, %v3014
  %v3058 = vmul.f32 %v2664, %v3016
  %v3059 = vmul.f32 %v2666, %v3018
  %v3060 = vmul.f32 %v2668, %v3020
  %v3061 = vmul.f32 %v2670, %v3022
  %v3062 = vmul.f32 %v2672, %v3024
  %v3063 = vmul.f32 %v2674, %v3026
  %v3064 = vmul.f32 %v2676, %v3028
  %v3065 = vmul.f32 %v2678, %v3030
  %v3066 = vmul.f32 %v2680, %v3032
  %v3067 = vmul.f32 %v2682, %v3034
  %v3068 = vmul.f32 %v2684, %v3036
  %3085 = vrot.lane.b32.xlu0 %v3053, 64
  %v3086 = vpop.permute.xlu0 %3085
  %3087 = vrot.lane.b32.xlu0 %v3054, 64
  %v3088 = vpop.permute.xlu0 %3087
  %3089 = vrot.lane.b32.xlu0 %v3055, 64
  %v3090 = vpop.permute.xlu0 %3089
  %3091 = vrot.lane.b32.xlu0 %v3056, 64
  %v3092 = vpop.permute.xlu0 %3091
  %3093 = vrot.lane.b32.xlu0 %v3057, 64
  %v3094 = vpop.permute.xlu0 %3093
  %3095 = vrot.lane.b32.xlu0 %v3058, 64
  %v3096 = vpop.permute.xlu0 %3095
  %3097 = vrot.lane.b32.xlu0 %v3059, 64
  %v3098 = vpop.permute.xlu0 %3097
  %3099 = vrot.lane.b32.xlu0 %v3060, 64
  %v3100 = vpop.permute.xlu0 %3099
  %3101 = vrot.lane.b32.xlu0 %v3061, 64
  %v3102 = vpop.permute.xlu0 %3101
  %3103 = vrot.lane.b32.xlu0 %v3062, 64
  %v3104 = vpop.permute.xlu0 %3103
  %3105 = vrot.lane.b32.xlu0 %v3063, 64
  %v3106 = vpop.permute.xlu0 %3105
  %3107 = vrot.lane.b32.xlu0 %v3064, 64
  %v3108 = vpop.permute.xlu0 %3107
  %3109 = vrot.lane.b32.xlu0 %v3065, 64
  %v3110 = vpop.permute.xlu0 %3109
  %3111 = vrot.lane.b32.xlu0 %v3066, 64
  %v3112 = vpop.permute.xlu0 %3111
  %3113 = vrot.lane.b32.xlu0 %v3067, 64
  %v3114 = vpop.permute.xlu0 %3113
  %3115 = vrot.lane.b32.xlu0 %v3068, 64
  %v3116 = vpop.permute.xlu0 %3115
  %v3133 = vsel %vm1979, %v3086, %v2957
  %v3134 = vsel %vm1979, %v3088, %v2958
  %v3135 = vsel %vm1979, %v3090, %v2959
  %v3136 = vsel %vm1979, %v3092, %v2960
  %v3137 = vsel %vm1979, %v3094, %v2961
  %v3138 = vsel %vm1979, %v3096, %v2962
  %v3139 = vsel %vm1979, %v3098, %v2963
  %v3140 = vsel %vm1979, %v3100, %v2964
  %v3141 = vsel %vm1979, %v3102, %v2965
  %v3142 = vsel %vm1979, %v3104, %v2966
  %v3143 = vsel %vm1979, %v3106, %v2967
  %v3144 = vsel %vm1979, %v3108, %v2968
  %v3145 = vsel %vm1979, %v3110, %v2969
  %v3146 = vsel %vm1979, %v3112, %v2970
  %v3147 = vsel %vm1979, %v3114, %v2971
  %v3148 = vsel %vm1979, %v3116, %v2972
  %3149 = vst.msk [vmem:[%s4 + $0x100] sm:$0xff] %vm1996, %v3133
  %3150 = vst.msk [vmem:[%s4 + $0x108] sm:$0xff] %vm1996, %v3134
  %3151 = vst.msk [vmem:[%s4 + $0x110] sm:$0xff] %vm1996, %v3135
  %3152 = vst.msk [vmem:[%s4 + $0x118] sm:$0xff] %vm1996, %v3136
  %3153 = vst.msk [vmem:[%s4 + $0x120] sm:$0xff] %vm1996, %v3137
  %3154 = vst.msk [vmem:[%s4 + $0x128] sm:$0xff] %vm1996, %v3138
  %3155 = vst.msk [vmem:[%s4 + $0x130] sm:$0xff] %vm1996, %v3139
  %3156 = vst.msk [vmem:[%s4 + $0x138] sm:$0xff] %vm1996, %v3140
  %3157 = vst.msk [vmem:[%s4 + $0x140] sm:$0xff] %vm1996, %v3141
  %3158 = vst.msk [vmem:[%s4 + $0x148] sm:$0xff] %vm1996, %v3142
  %3159 = vst.msk [vmem:[%s4 + $0x150] sm:$0xff] %vm1996, %v3143
  %3160 = vst.msk [vmem:[%s4 + $0x158] sm:$0xff] %vm1996, %v3144
  %3161 = vst.msk [vmem:[%s4 + $0x160] sm:$0xff] %vm1996, %v3145
  %3162 = vst.msk [vmem:[%s4 + $0x168] sm:$0xff] %vm1996, %v3146
  %3163 = vst.msk [vmem:[%s4 + $0x170] sm:$0xff] %vm1996, %v3147
  %3164 = vst.msk [vmem:[%s4 + $0x178] sm:$0xff] %vm1996, %v3148
  %v3165 = vxor.u32 %v1373, 2147483648
  %v3166 = vxor.u32 %v1376, 2147483648
  %v3167 = vxor.u32 %v1381, 2147483648
  %v3168 = vxor.u32 %v1384, 2147483648
  %v3169 = vxor.u32 %v1389, 2147483648
  %v3170 = vxor.u32 %v1392, 2147483648
  %v3171 = vxor.u32 %v1397, 2147483648
  %v3172 = vxor.u32 %v1400, 2147483648
  %v3173 = vxor.u32 %v1405, 2147483648
  %v3174 = vxor.u32 %v1408, 2147483648
  %v3175 = vxor.u32 %v1413, 2147483648
  %v3176 = vxor.u32 %v1416, 2147483648
  %v3177 = vxor.u32 %v1421, 2147483648
  %v3178 = vxor.u32 %v1424, 2147483648
  %v3179 = vxor.u32 %v1429, 2147483648
  %v3180 = vxor.u32 %v1432, 2147483648
  %v3181 = vmul.f32 %v3165, 1.442695
  %v3182 = vpow.pop %v3181
  %v3183 = vmul.f32 %v3166, 1.442695
  %v3184 = vpow.pop %v3183
  %v3185 = vmul.f32 %v3167, 1.442695
  %v3186 = vpow.pop %v3185
  %v3187 = vmul.f32 %v3168, 1.442695
  %v3188 = vpow.pop %v3187
  %v3189 = vmul.f32 %v3169, 1.442695
  %v3190 = vpow.pop %v3189
  %v3191 = vmul.f32 %v3170, 1.442695
  %v3192 = vpow.pop %v3191
  %v3193 = vmul.f32 %v3171, 1.442695
  %v3194 = vpow.pop %v3193
  %v3195 = vmul.f32 %v3172, 1.442695
  %v3196 = vpow.pop %v3195
  %v3197 = vmul.f32 %v3173, 1.442695
  %v3198 = vpow.pop %v3197
  %v3199 = vmul.f32 %v3174, 1.442695
  %v3200 = vpow.pop %v3199
  %v3201 = vmul.f32 %v3175, 1.442695
  %v3202 = vpow.pop %v3201
  %v3203 = vmul.f32 %v3176, 1.442695
  %v3204 = vpow.pop %v3203
  %v3205 = vmul.f32 %v3177, 1.442695
  %v3206 = vpow.pop %v3205
  %v3207 = vmul.f32 %v3178, 1.442695
  %v3208 = vpow.pop %v3207
  %v3209 = vmul.f32 %v3179, 1.442695
  %v3210 = vpow.pop %v3209
  %v3211 = vmul.f32 %v3180, 1.442695
  %v3212 = vpow.pop %v3211
  %v3213 = vadd.f32 %v3182, 1.0
  %v3214 = vadd.f32 %v3184, 1.0
  %v3215 = vadd.f32 %v3186, 1.0
  %v3216 = vadd.f32 %v3188, 1.0
  %v3217 = vadd.f32 %v3190, 1.0
  %v3218 = vadd.f32 %v3192, 1.0
  %v3219 = vadd.f32 %v3194, 1.0
  %v3220 = vadd.f32 %v3196, 1.0
  %v3221 = vadd.f32 %v3198, 1.0
  %v3222 = vadd.f32 %v3200, 1.0
  %v3223 = vadd.f32 %v3202, 1.0
  %v3224 = vadd.f32 %v3204, 1.0
  %v3225 = vadd.f32 %v3206, 1.0
  %v3226 = vadd.f32 %v3208, 1.0
  %v3227 = vadd.f32 %v3210, 1.0
  %v3228 = vadd.f32 %v3212, 1.0
  %v3229 = vrcp.pop %v3213
  %v3230 = vmul.f32 1.0, %v3229
  %v3231 = vrcp.pop %v3214
  %v3232 = vmul.f32 1.0, %v3231
  %v3233 = vrcp.pop %v3215
  %v3234 = vmul.f32 1.0, %v3233
  %v3235 = vrcp.pop %v3216
  %v3236 = vmul.f32 1.0, %v3235
  %v3237 = vrcp.pop %v3217
  %v3238 = vmul.f32 1.0, %v3237
  %v3239 = vrcp.pop %v3218
  %v3240 = vmul.f32 1.0, %v3239
  %v3241 = vrcp.pop %v3219
  %v3242 = vmul.f32 1.0, %v3241
  %v3243 = vrcp.pop %v3220
  %v3244 = vmul.f32 1.0, %v3243
  %v3245 = vrcp.pop %v3221
  %v3246 = vmul.f32 1.0, %v3245
  %v3247 = vrcp.pop %v3222
  %v3248 = vmul.f32 1.0, %v3247
  %v3249 = vrcp.pop %v3223
  %v3250 = vmul.f32 1.0, %v3249
  %v3251 = vrcp.pop %v3224
  %v3252 = vmul.f32 1.0, %v3251
  %v3253 = vrcp.pop %v3225
  %v3254 = vmul.f32 1.0, %v3253
  %v3255 = vrcp.pop %v3226
  %v3256 = vmul.f32 1.0, %v3255
  %v3257 = vrcp.pop %v3227
  %v3258 = vmul.f32 1.0, %v3257
  %v3259 = vrcp.pop %v3228
  %v3260 = vmul.f32 1.0, %v3259
  %v3261 = vld [vmem:[%s3 + $0x180] sm:$0xff]
  %v3262 = vld [vmem:[%s3 + $0x188] sm:$0xff]
  %v3263 = vld [vmem:[%s3 + $0x190] sm:$0xff]
  %v3264 = vld [vmem:[%s3 + $0x198] sm:$0xff]
  %v3265 = vld [vmem:[%s3 + $0x1a0] sm:$0xff]
  %v3266 = vld [vmem:[%s3 + $0x1a8] sm:$0xff]
  %v3267 = vld [vmem:[%s3 + $0x1b0] sm:$0xff]
  %v3268 = vld [vmem:[%s3 + $0x1b8] sm:$0xff]
  %v3269 = vld [vmem:[%s3 + $0x1c0] sm:$0xff]
  %v3270 = vld [vmem:[%s3 + $0x1c8] sm:$0xff]
  %v3271 = vld [vmem:[%s3 + $0x1d0] sm:$0xff]
  %v3272 = vld [vmem:[%s3 + $0x1d8] sm:$0xff]
  %v3273 = vld [vmem:[%s3 + $0x1e0] sm:$0xff]
  %v3274 = vld [vmem:[%s3 + $0x1e8] sm:$0xff]
  %v3275 = vld [vmem:[%s3 + $0x1f0] sm:$0xff]
  %v3276 = vld [vmem:[%s3 + $0x1f8] sm:$0xff]
  %3293 = vrot.lane.b32.xlu0 %v3261, 32
  %v3294 = vpop.permute.xlu0 %3293
  %3295 = vrot.lane.b32.xlu0 %v3262, 32
  %v3296 = vpop.permute.xlu0 %3295
  %3297 = vrot.lane.b32.xlu0 %v3263, 32
  %v3298 = vpop.permute.xlu0 %3297
  %3299 = vrot.lane.b32.xlu0 %v3264, 32
  %v3300 = vpop.permute.xlu0 %3299
  %3301 = vrot.lane.b32.xlu0 %v3265, 32
  %v3302 = vpop.permute.xlu0 %3301
  %3303 = vrot.lane.b32.xlu0 %v3266, 32
  %v3304 = vpop.permute.xlu0 %3303
  %3305 = vrot.lane.b32.xlu0 %v3267, 32
  %v3306 = vpop.permute.xlu0 %3305
  %3307 = vrot.lane.b32.xlu0 %v3268, 32
  %v3308 = vpop.permute.xlu0 %3307
  %3309 = vrot.lane.b32.xlu0 %v3269, 32
  %v3310 = vpop.permute.xlu0 %3309
  %3311 = vrot.lane.b32.xlu0 %v3270, 32
  %v3312 = vpop.permute.xlu0 %3311
  %3313 = vrot.lane.b32.xlu0 %v3271, 32
  %v3314 = vpop.permute.xlu0 %3313
  %3315 = vrot.lane.b32.xlu0 %v3272, 32
  %v3316 = vpop.permute.xlu0 %3315
  %3317 = vrot.lane.b32.xlu0 %v3273, 32
  %v3318 = vpop.permute.xlu0 %3317
  %3319 = vrot.lane.b32.xlu0 %v3274, 32
  %v3320 = vpop.permute.xlu0 %3319
  %3321 = vrot.lane.b32.xlu0 %v3275, 32
  %v3322 = vpop.permute.xlu0 %3321
  %3323 = vrot.lane.b32.xlu0 %v3276, 32
  %v3324 = vpop.permute.xlu0 %3323
  %v3341 = vmul.f32 %v3230, %v3294
  %v3342 = vmul.f32 %v3232, %v3296
  %v3343 = vmul.f32 %v3234, %v3298
  %v3344 = vmul.f32 %v3236, %v3300
  %v3345 = vmul.f32 %v3238, %v3302
  %v3346 = vmul.f32 %v3240, %v3304
  %v3347 = vmul.f32 %v3242, %v3306
  %v3348 = vmul.f32 %v3244, %v3308
  %v3349 = vmul.f32 %v3246, %v3310
  %v3350 = vmul.f32 %v3248, %v3312
  %v3351 = vmul.f32 %v3250, %v3314
  %v3352 = vmul.f32 %v3252, %v3316
  %v3353 = vmul.f32 %v3254, %v3318
  %v3354 = vmul.f32 %v3256, %v3320
  %v3355 = vmul.f32 %v3258, %v3322
  %v3356 = vmul.f32 %v3260, %v3324
  %3373 = vrot.lane.b32.xlu0 %v3230, 32
  %v3374 = vpop.permute.xlu0 %3373
  %3375 = vrot.lane.b32.xlu0 %v3232, 32
  %v3376 = vpop.permute.xlu0 %3375
  %3377 = vrot.lane.b32.xlu0 %v3234, 32
  %v3378 = vpop.permute.xlu0 %3377
  %3379 = vrot.lane.b32.xlu0 %v3236, 32
  %v3380 = vpop.permute.xlu0 %3379
  %3381 = vrot.lane.b32.xlu0 %v3238, 32
  %v3382 = vpop.permute.xlu0 %3381
  %3383 = vrot.lane.b32.xlu0 %v3240, 32
  %v3384 = vpop.permute.xlu0 %3383
  %3385 = vrot.lane.b32.xlu0 %v3242, 32
  %v3386 = vpop.permute.xlu0 %3385
  %3387 = vrot.lane.b32.xlu0 %v3244, 32
  %v3388 = vpop.permute.xlu0 %3387
  %3389 = vrot.lane.b32.xlu0 %v3246, 32
  %v3390 = vpop.permute.xlu0 %3389
  %3391 = vrot.lane.b32.xlu0 %v3248, 32
  %v3392 = vpop.permute.xlu0 %3391
  %3393 = vrot.lane.b32.xlu0 %v3250, 32
  %v3394 = vpop.permute.xlu0 %3393
  %3395 = vrot.lane.b32.xlu0 %v3252, 32
  %v3396 = vpop.permute.xlu0 %3395
  %3397 = vrot.lane.b32.xlu0 %v3254, 32
  %v3398 = vpop.permute.xlu0 %3397
  %3399 = vrot.lane.b32.xlu0 %v3256, 32
  %v3400 = vpop.permute.xlu0 %3399
  %3401 = vrot.lane.b32.xlu0 %v3258, 32
  %v3402 = vpop.permute.xlu0 %3401
  %3403 = vrot.lane.b32.xlu0 %v3260, 32
  %v3404 = vpop.permute.xlu0 %3403
  %v3421 = vmul.f32 %v3230, %v3374
  %v3422 = vmul.f32 %v3232, %v3376
  %v3423 = vmul.f32 %v3234, %v3378
  %v3424 = vmul.f32 %v3236, %v3380
  %v3425 = vmul.f32 %v3238, %v3382
  %v3426 = vmul.f32 %v3240, %v3384
  %v3427 = vmul.f32 %v3242, %v3386
  %v3428 = vmul.f32 %v3244, %v3388
  %v3429 = vmul.f32 %v3246, %v3390
  %v3430 = vmul.f32 %v3248, %v3392
  %v3431 = vmul.f32 %v3250, %v3394
  %v3432 = vmul.f32 %v3252, %v3396
  %v3433 = vmul.f32 %v3254, %v3398
  %v3434 = vmul.f32 %v3256, %v3400
  %v3435 = vmul.f32 %v3258, %v3402
  %v3436 = vmul.f32 %v3260, %v3404
  %v3437 = vmul.f32 %v3421, 2.0
  %v3438 = vmul.f32 %v3422, 2.0
  %v3439 = vmul.f32 %v3423, 2.0
  %v3440 = vmul.f32 %v3424, 2.0
  %v3441 = vmul.f32 %v3425, 2.0
  %v3442 = vmul.f32 %v3426, 2.0
  %v3443 = vmul.f32 %v3427, 2.0
  %v3444 = vmul.f32 %v3428, 2.0
  %v3445 = vmul.f32 %v3429, 2.0
  %v3446 = vmul.f32 %v3430, 2.0
  %v3447 = vmul.f32 %v3431, 2.0
  %v3448 = vmul.f32 %v3432, 2.0
  %v3449 = vmul.f32 %v3433, 2.0
  %v3450 = vmul.f32 %v3434, 2.0
  %v3451 = vmul.f32 %v3435, 2.0
  %v3452 = vmul.f32 %v3436, 2.0
  %3469 = vrot.lane.b32.xlu0 %v3437, 32
  %v3470 = vpop.permute.xlu0 %3469
  %3471 = vrot.lane.b32.xlu0 %v3438, 32
  %v3472 = vpop.permute.xlu0 %3471
  %3473 = vrot.lane.b32.xlu0 %v3439, 32
  %v3474 = vpop.permute.xlu0 %3473
  %3475 = vrot.lane.b32.xlu0 %v3440, 32
  %v3476 = vpop.permute.xlu0 %3475
  %3477 = vrot.lane.b32.xlu0 %v3441, 32
  %v3478 = vpop.permute.xlu0 %3477
  %3479 = vrot.lane.b32.xlu0 %v3442, 32
  %v3480 = vpop.permute.xlu0 %3479
  %3481 = vrot.lane.b32.xlu0 %v3443, 32
  %v3482 = vpop.permute.xlu0 %3481
  %3483 = vrot.lane.b32.xlu0 %v3444, 32
  %v3484 = vpop.permute.xlu0 %3483
  %3485 = vrot.lane.b32.xlu0 %v3445, 32
  %v3486 = vpop.permute.xlu0 %3485
  %3487 = vrot.lane.b32.xlu0 %v3446, 32
  %v3488 = vpop.permute.xlu0 %3487
  %3489 = vrot.lane.b32.xlu0 %v3447, 32
  %v3490 = vpop.permute.xlu0 %3489
  %3491 = vrot.lane.b32.xlu0 %v3448, 32
  %v3492 = vpop.permute.xlu0 %3491
  %3493 = vrot.lane.b32.xlu0 %v3449, 32
  %v3494 = vpop.permute.xlu0 %3493
  %3495 = vrot.lane.b32.xlu0 %v3450, 32
  %v3496 = vpop.permute.xlu0 %3495
  %3497 = vrot.lane.b32.xlu0 %v3451, 32
  %v3498 = vpop.permute.xlu0 %3497
  %3499 = vrot.lane.b32.xlu0 %v3452, 32
  %v3500 = vpop.permute.xlu0 %3499
  %v3517 = vadd.f32 %v3341, %v3470
  %v3518 = vadd.f32 %v3342, %v3472
  %v3519 = vadd.f32 %v3343, %v3474
  %v3520 = vadd.f32 %v3344, %v3476
  %v3521 = vadd.f32 %v3345, %v3478
  %v3522 = vadd.f32 %v3346, %v3480
  %v3523 = vadd.f32 %v3347, %v3482
  %v3524 = vadd.f32 %v3348, %v3484
  %v3525 = vadd.f32 %v3349, %v3486
  %v3526 = vadd.f32 %v3350, %v3488
  %v3527 = vadd.f32 %v3351, %v3490
  %v3528 = vadd.f32 %v3352, %v3492
  %v3529 = vadd.f32 %v3353, %v3494
  %v3530 = vadd.f32 %v3354, %v3496
  %v3531 = vadd.f32 %v3355, %v3498
  %v3532 = vadd.f32 %v3356, %v3500
  %v3533 = vsub.f32 %v3517, %v3374
  %v3534 = vsub.f32 %v3518, %v3376
  %v3535 = vsub.f32 %v3519, %v3378
  %v3536 = vsub.f32 %v3520, %v3380
  %v3537 = vsub.f32 %v3521, %v3382
  %v3538 = vsub.f32 %v3522, %v3384
  %v3539 = vsub.f32 %v3523, %v3386
  %v3540 = vsub.f32 %v3524, %v3388
  %v3541 = vsub.f32 %v3525, %v3390
  %v3542 = vsub.f32 %v3526, %v3392
  %v3543 = vsub.f32 %v3527, %v3394
  %v3544 = vsub.f32 %v3528, %v3396
  %v3545 = vsub.f32 %v3529, %v3398
  %v3546 = vsub.f32 %v3530, %v3400
  %v3547 = vsub.f32 %v3531, %v3402
  %v3548 = vsub.f32 %v3532, %v3404
  %v3549 = vtanh.pop %v3533
  %v3550 = vtanh.pop %v3534
  %v3551 = vtanh.pop %v3535
  %v3552 = vtanh.pop %v3536
  %v3553 = vtanh.pop %v3537
  %v3554 = vtanh.pop %v3538
  %v3555 = vtanh.pop %v3539
  %v3556 = vtanh.pop %v3540
  %v3557 = vtanh.pop %v3541
  %v3558 = vtanh.pop %v3542
  %v3559 = vtanh.pop %v3543
  %v3560 = vtanh.pop %v3544
  %v3561 = vtanh.pop %v3545
  %v3562 = vtanh.pop %v3546
  %v3563 = vtanh.pop %v3547
  %v3564 = vtanh.pop %v3548
  %3581 = vrot.lane.b32.xlu0 %v3549, 32
  %v3582 = vpop.permute.xlu0 %3581
  %3583 = vrot.lane.b32.xlu0 %v3550, 32
  %v3584 = vpop.permute.xlu0 %3583
  %3585 = vrot.lane.b32.xlu0 %v3551, 32
  %v3586 = vpop.permute.xlu0 %3585
  %3587 = vrot.lane.b32.xlu0 %v3552, 32
  %v3588 = vpop.permute.xlu0 %3587
  %3589 = vrot.lane.b32.xlu0 %v3553, 32
  %v3590 = vpop.permute.xlu0 %3589
  %3591 = vrot.lane.b32.xlu0 %v3554, 32
  %v3592 = vpop.permute.xlu0 %3591
  %3593 = vrot.lane.b32.xlu0 %v3555, 32
  %v3594 = vpop.permute.xlu0 %3593
  %3595 = vrot.lane.b32.xlu0 %v3556, 32
  %v3596 = vpop.permute.xlu0 %3595
  %3597 = vrot.lane.b32.xlu0 %v3557, 32
  %v3598 = vpop.permute.xlu0 %3597
  %3599 = vrot.lane.b32.xlu0 %v3558, 32
  %v3600 = vpop.permute.xlu0 %3599
  %3601 = vrot.lane.b32.xlu0 %v3559, 32
  %v3602 = vpop.permute.xlu0 %3601
  %3603 = vrot.lane.b32.xlu0 %v3560, 32
  %v3604 = vpop.permute.xlu0 %3603
  %3605 = vrot.lane.b32.xlu0 %v3561, 32
  %v3606 = vpop.permute.xlu0 %3605
  %3607 = vrot.lane.b32.xlu0 %v3562, 32
  %v3608 = vpop.permute.xlu0 %3607
  %3609 = vrot.lane.b32.xlu0 %v3563, 32
  %v3610 = vpop.permute.xlu0 %3609
  %3611 = vrot.lane.b32.xlu0 %v3564, 32
  %v3612 = vpop.permute.xlu0 %3611
  %v3629 = vmul.f32 %v3230, %v3582
  %v3630 = vmul.f32 %v3232, %v3584
  %v3631 = vmul.f32 %v3234, %v3586
  %v3632 = vmul.f32 %v3236, %v3588
  %v3633 = vmul.f32 %v3238, %v3590
  %v3634 = vmul.f32 %v3240, %v3592
  %v3635 = vmul.f32 %v3242, %v3594
  %v3636 = vmul.f32 %v3244, %v3596
  %v3637 = vmul.f32 %v3246, %v3598
  %v3638 = vmul.f32 %v3248, %v3600
  %v3639 = vmul.f32 %v3250, %v3602
  %v3640 = vmul.f32 %v3252, %v3604
  %v3641 = vmul.f32 %v3254, %v3606
  %v3642 = vmul.f32 %v3256, %v3608
  %v3643 = vmul.f32 %v3258, %v3610
  %v3644 = vmul.f32 %v3260, %v3612
  %3661 = vrot.lane.b32.xlu0 %v3629, 64
  %v3662 = vpop.permute.xlu0 %3661
  %3663 = vrot.lane.b32.xlu0 %v3630, 64
  %v3664 = vpop.permute.xlu0 %3663
  %3665 = vrot.lane.b32.xlu0 %v3631, 64
  %v3666 = vpop.permute.xlu0 %3665
  %3667 = vrot.lane.b32.xlu0 %v3632, 64
  %v3668 = vpop.permute.xlu0 %3667
  %3669 = vrot.lane.b32.xlu0 %v3633, 64
  %v3670 = vpop.permute.xlu0 %3669
  %3671 = vrot.lane.b32.xlu0 %v3634, 64
  %v3672 = vpop.permute.xlu0 %3671
  %3673 = vrot.lane.b32.xlu0 %v3635, 64
  %v3674 = vpop.permute.xlu0 %3673
  %3675 = vrot.lane.b32.xlu0 %v3636, 64
  %v3676 = vpop.permute.xlu0 %3675
  %3677 = vrot.lane.b32.xlu0 %v3637, 64
  %v3678 = vpop.permute.xlu0 %3677
  %3679 = vrot.lane.b32.xlu0 %v3638, 64
  %v3680 = vpop.permute.xlu0 %3679
  %3681 = vrot.lane.b32.xlu0 %v3639, 64
  %v3682 = vpop.permute.xlu0 %3681
  %3683 = vrot.lane.b32.xlu0 %v3640, 64
  %v3684 = vpop.permute.xlu0 %3683
  %3685 = vrot.lane.b32.xlu0 %v3641, 64
  %v3686 = vpop.permute.xlu0 %3685
  %3687 = vrot.lane.b32.xlu0 %v3642, 64
  %v3688 = vpop.permute.xlu0 %3687
  %3689 = vrot.lane.b32.xlu0 %v3643, 64
  %v3690 = vpop.permute.xlu0 %3689
  %3691 = vrot.lane.b32.xlu0 %v3644, 64
  %v3692 = vpop.permute.xlu0 %3691
  %v3709 = vsel %vm1979, %v3662, %v3533
  %v3710 = vsel %vm1979, %v3664, %v3534
  %v3711 = vsel %vm1979, %v3666, %v3535
  %v3712 = vsel %vm1979, %v3668, %v3536
  %v3713 = vsel %vm1979, %v3670, %v3537
  %v3714 = vsel %vm1979, %v3672, %v3538
  %v3715 = vsel %vm1979, %v3674, %v3539
  %v3716 = vsel %vm1979, %v3676, %v3540
  %v3717 = vsel %vm1979, %v3678, %v3541
  %v3718 = vsel %vm1979, %v3680, %v3542
  %v3719 = vsel %vm1979, %v3682, %v3543
  %v3720 = vsel %vm1979, %v3684, %v3544
  %v3721 = vsel %vm1979, %v3686, %v3545
  %v3722 = vsel %vm1979, %v3688, %v3546
  %v3723 = vsel %vm1979, %v3690, %v3547
  %v3724 = vsel %vm1979, %v3692, %v3548
  %3725 = vst.msk [vmem:[%s4 + $0x180] sm:$0xff] %vm1996, %v3709
  %3726 = vst.msk [vmem:[%s4 + $0x188] sm:$0xff] %vm1996, %v3710
  %3727 = vst.msk [vmem:[%s4 + $0x190] sm:$0xff] %vm1996, %v3711
  %3728 = vst.msk [vmem:[%s4 + $0x198] sm:$0xff] %vm1996, %v3712
  %3729 = vst.msk [vmem:[%s4 + $0x1a0] sm:$0xff] %vm1996, %v3713
  %3730 = vst.msk [vmem:[%s4 + $0x1a8] sm:$0xff] %vm1996, %v3714
  %3731 = vst.msk [vmem:[%s4 + $0x1b0] sm:$0xff] %vm1996, %v3715
  %3732 = vst.msk [vmem:[%s4 + $0x1b8] sm:$0xff] %vm1996, %v3716
  %3733 = vst.msk [vmem:[%s4 + $0x1c0] sm:$0xff] %vm1996, %v3717
  %3734 = vst.msk [vmem:[%s4 + $0x1c8] sm:$0xff] %vm1996, %v3718
  %3735 = vst.msk [vmem:[%s4 + $0x1d0] sm:$0xff] %vm1996, %v3719
  %3736 = vst.msk [vmem:[%s4 + $0x1d8] sm:$0xff] %vm1996, %v3720
  %3737 = vst.msk [vmem:[%s4 + $0x1e0] sm:$0xff] %vm1996, %v3721
  %3738 = vst.msk [vmem:[%s4 + $0x1e8] sm:$0xff] %vm1996, %v3722
  %3739 = vst.msk [vmem:[%s4 + $0x1f0] sm:$0xff] %vm1996, %v3723
  %3740 = vst.msk [vmem:[%s4 + $0x1f8] sm:$0xff] %vm1996, %v3724
  // Predicated region
  $region18: #{conv_lstm_cell.1} parent=0 // pred_check
    _
  $region19: #{conv_lstm_cell.1} parent=0 // pred_check_branch
    %3742 = sbr.rel (0) target = $region21
  $region20: #{conv_lstm_cell.1} parent=0 // pred_region
    _
  $region21: #{conv_lstm_cell.1} parent=0 // pred_fallthru
    _
  // Predicated region
  $region22: #{conv_lstm_cell.1} parent=0 // pred_check
    _
  $region23: #{conv_lstm_cell.1} parent=0 // pred_check_branch
    %3744 = sbr.rel (0) target = $region25
  $region24: #{conv_lstm_cell.1} parent=0 // pred_region
    _
  $region25: #{conv_lstm_cell.1} parent=0 // pred_fallthru
    _

</llo_original>
